<compile_context>
chip_gen: v7x
topology: tpu7x:2x2x1
jax: 0.10.0
libtpu: 0.0.40
codegen_flags: <defaults>
</compile_context>

<pallas_src>
import functools
import math

import jax
import jax.numpy as jnp
from jax.experimental import pallas as pl
from jax.experimental.pallas import tpu as pltpu


# ------------------------------ kernel helpers ------------------------------ #

def _ln(x, g, b, eps):
    """Reference LayerNorm: unbiased std, eps outside sqrt. x:[M,D] f32, g/b:[1,D]."""
    d = x.shape[-1]
    mean = jnp.mean(x, axis=-1, keepdims=True)
    xc = x - mean
    var_unbiased = jnp.sum(xc * xc, axis=-1, keepdims=True) / (d - 1)
    std = jnp.sqrt(var_unbiased)
    return g * xc / (std + eps) + b


# ----------------------------- Pallas kernels ------------------------------ #

def _ln_qkv_kernel(x_ref, g_ref, b_ref, w_ref, wb_ref,
                   oq_ref, ok_ref, ov_ref, *, eps):
    """Fused LayerNorm + concatenated Q/K/V projection (self-attention)."""
    y = _ln(x_ref[...].astype(jnp.float32), g_ref[...], b_ref[...], eps)
    z = jnp.dot(y, w_ref[...], preferred_element_type=jnp.float32) + wb_ref[...]
    hd = oq_ref.shape[-1]
    oq_ref[...] = z[:, :hd].astype(oq_ref.dtype)
    ok_ref[...] = z[:, hd:2 * hd].astype(ok_ref.dtype)
    ov_ref[...] = z[:, 2 * hd:].astype(ov_ref.dtype)


def _ln_linear_kernel(x_ref, g_ref, b_ref, w_ref, wb_ref, o_ref, *, eps):
    """Fused LayerNorm + single projection (cross-attention query)."""
    y = _ln(x_ref[...].astype(jnp.float32), g_ref[...], b_ref[...], eps)
    o_ref[...] = (jnp.dot(y, w_ref[...], preferred_element_type=jnp.float32)
                  + wb_ref[...]).astype(o_ref.dtype)


def _linear_split2_kernel(x_ref, w_ref, wb_ref, ok_ref, ov_ref):
    """Concatenated K/V projection of the (un-normed) encoder memory."""
    z = jnp.dot(x_ref[...].astype(jnp.float32), w_ref[...],
                preferred_element_type=jnp.float32) + wb_ref[...]
    hd = ok_ref.shape[-1]
    ok_ref[...] = z[:, :hd].astype(ok_ref.dtype)
    ov_ref[...] = z[:, hd:].astype(ov_ref.dtype)


def _linear_residual_kernel(x_ref, r_ref, w_ref, wb_ref, o_ref):
    """Fused attention output projection + residual add."""
    y = jnp.dot(x_ref[...].astype(jnp.float32), w_ref[...],
                preferred_element_type=jnp.float32)
    o_ref[...] = (y + wb_ref[...] + r_ref[...].astype(jnp.float32)).astype(o_ref.dtype)


def _ffn_kernel(x_ref, g_ref, b_ref, w1_ref, b1_ref, w2_ref, b2_ref, o_ref, *, eps):
    """Fused sublayer 2: x + W2(relu(W1(LN(x))))  (dropout = identity)."""
    x = x_ref[...].astype(jnp.float32)
    y = _ln(x, g_ref[...], b_ref[...], eps)
    h = jnp.maximum(jnp.dot(y, w1_ref[...], preferred_element_type=jnp.float32)
                    + b1_ref[...], 0.0)
    o = jnp.dot(h, w2_ref[...], preferred_element_type=jnp.float32) + b2_ref[...] + x
    o_ref[...] = o.astype(o_ref.dtype)


def _mha_kernel(q_ref, k_ref, v_ref, m_ref, o_ref, *, n_heads, d_model, scale):
    """One batch (all heads) per grid step.

    q/k/v blocks are [1, T, H*D]; each head occupies a contiguous D-wide column
    slice (reference MultiHeadedAttention: per-head full-d_model projections).
    Output is one lane-dense [T, H*D] store.
    """
    q = q_ref[0].astype(jnp.float32)          # [Tq, H*D]
    k = k_ref[0].astype(jnp.float32)          # [Tk, H*D]
    v = v_ref[0].astype(jnp.float32)          # [Tk, H*D]
    masked = m_ref[0] == 0                    # [Tq, Tk], True == masked out
    outs = []
    for h in range(n_heads):                  # statically unrolled (h is small)
        sl = slice(h * d_model, (h + 1) * d_model)
        s = jnp.dot(q[:, sl], k[:, sl].T, preferred_element_type=jnp.float32) * scale
        s = jnp.where(masked, -1e9, s)        # masked_fill(mask == 0, -1e9)
        s = s - jnp.max(s, axis=-1, keepdims=True)
        p = jnp.exp(s)
        p = p * pl.reciprocal(jnp.sum(p, axis=-1, keepdims=True), approx=True)
        outs.append(jnp.dot(p, v[:, sl], preferred_element_type=jnp.float32))
    o_ref[0] = jnp.concatenate(outs, axis=-1).astype(o_ref.dtype)


# ------------------------------ kernel wrappers ----------------------------- #

def _rows_call(kernel, row_inputs, const_inputs, out_cols, out_dtype):
    """Run `kernel` over row tiles of 2-D slabs.

    row_inputs:   list of [M, Ki] arrays, tiled along rows.
    const_inputs: list of 2-D arrays (weights/biases/gammas) loaded whole,
                  constant index_map -> stay resident across the row grid.
    out_cols:     tuple of output widths; each output is [M, n].
    Kernel signature: kernel(*row_refs, *const_refs, *out_refs).
    """
    M = row_inputs[0].shape[0]
    tile = M if M <= 512 else 256             # whole slab in one step when small
    Mp = ((M + tile - 1) // tile) * tile
    padded = [jnp.pad(a, ((0, Mp - M), (0, 0))) if Mp != M else a for a in row_inputs]
    grid = (Mp // tile,)

    in_specs = (
        [pl.BlockSpec((tile, a.shape[1]), lambda i: (i, 0)) for a in padded]
        + [pl.BlockSpec(c.shape, lambda i: (0, 0)) for c in const_inputs]
    )
    multi = len(out_cols) > 1
    out_shape = tuple(jax.ShapeDtypeStruct((Mp, n), out_dtype) for n in out_cols)
    out_specs = tuple(pl.BlockSpec((tile, n), lambda i: (i, 0)) for n in out_cols)
    if not multi:
        out_shape, out_specs = out_shape[0], out_specs[0]

    res = pl.pallas_call(
        kernel,
        out_shape=out_shape,
        grid=grid,
        in_specs=in_specs,
        out_specs=out_specs,
        compiler_params=pltpu.CompilerParams(dimension_semantics=("parallel",)),
    )(*padded, *const_inputs)

    if not multi:
        res = (res,)
    res = tuple(r[:M] if Mp != M else r for r in res)
    return res if multi else res[0]


def _attention(q, k, v, mask, n_heads, d_model):
    """q: [B, Tq, H*D]; k, v: [B, Tk, H*D]; mask: [B, Tq, Tk] int (0 = masked)."""
    B, Tq, HD = q.shape
    Tk = k.shape[1]
    scale = 1.0 / math.sqrt(d_model)          # reference: scores /= sqrt(key.size(2))
    return pl.pallas_call(
        functools.partial(_mha_kernel, n_heads=n_heads, d_model=d_model, scale=scale),
        out_shape=jax.ShapeDtypeStruct((B, Tq, HD), q.dtype),
        grid=(B,),
        in_specs=[
            pl.BlockSpec((1, Tq, HD), lambda b: (b, 0, 0)),
            pl.BlockSpec((1, Tk, HD), lambda b: (b, 0, 0)),
            pl.BlockSpec((1, Tk, HD), lambda b: (b, 0, 0)),
            pl.BlockSpec((1, Tq, Tk), lambda b: (b, 0, 0)),
        ],
        out_specs=pl.BlockSpec((1, Tq, HD), lambda b: (b, 0, 0)),
        compiler_params=pltpu.CompilerParams(dimension_semantics=("parallel",)),
    )(q, k, v, mask)


# ------------------------------ decoder forward ----------------------------- #

def decoder_layer(x, memory, src_mask, tgt_mask, p, n_heads, eps=1e-6):
    B, T, D = x.shape
    S = memory.shape[1]
    HD = n_heads * D
    x2 = x.reshape(B * T, D)
    m2 = memory.reshape(B * S, D)

    # sublayer 0: x + self_attn(LN(x), LN(x), LN(x), tgt_mask)
    sa = p["self_attn"]
    q, k, v = _rows_call(
        functools.partial(_ln_qkv_kernel, eps=eps),
        [x2], [p["ln0_g"], p["ln0_b"], sa["wqkv"], sa["bqkv"]],
        (HD, HD, HD), x.dtype)
    ctx = _attention(q.reshape(B, T, HD), k.reshape(B, T, HD), v.reshape(B, T, HD),
                     tgt_mask, n_heads, D)
    x2 = _rows_call(_linear_residual_kernel,
                    [ctx.reshape(B * T, HD), x2], [sa["wo"], sa["bo"]],
                    (D,), x.dtype)

    # sublayer 1: x + src_attn(LN(x), memory, memory, src_mask)
    ca = p["src_attn"]
    q = _rows_call(functools.partial(_ln_linear_kernel, eps=eps),
                   [x2], [p["ln1_g"], p["ln1_b"], ca["wq"], ca["bq"]],
                   (HD,), x.dtype)
    k, v = _rows_call(_linear_split2_kernel,
                      [m2], [ca["wkv"], ca["bkv"]], (HD, HD), x.dtype)
    ctx = _attention(q.reshape(B, T, HD), k.reshape(B, S, HD), v.reshape(B, S, HD),
                     src_mask, n_heads, D)
    x2 = _rows_call(_linear_residual_kernel,
                    [ctx.reshape(B * T, HD), x2], [ca["wo"], ca["bo"]],
                    (D,), x.dtype)

    # sublayer 2: x + W2(relu(W1(LN(x))))
    x2 = _rows_call(functools.partial(_ffn_kernel, eps=eps),
                    [x2], [p["ln2_g"], p["ln2_b"],
                           p["ffn_w1"], p["ffn_b1"], p["ffn_w2"], p["ffn_b2"]],
                    (D,), x.dtype)
    return x2.reshape(B, T, D)


def decoder_forward(x, memory, src_mask, tgt_mask, layer_params, n_heads):
    # Matches the reference Decoder.forward exactly: loop over cloned layers,
    # return x WITHOUT applying the final self.norm (it is never used in forward).
    for p in layer_params:
        x = decoder_layer(x, memory, src_mask, tgt_mask, p, n_heads)
    return x


# ------------------------------ parameter setup ----------------------------- #

def init_decoder_params(key, n_layers, D, H):
    HD = H * D
    s = 0.05
    params = []
    for _ in range(n_layers):
        key, *ks = jax.random.split(key, 8)
        params.append({
            "self_attn": {
                # per-head [D,D] q/k/v projections concatenated column-wise -> one matmul
                "wqkv": s * jax.random.normal(ks[0], (D, 3 * HD), jnp.float32),
                "bqkv": jnp.zeros((1, 3 * HD), jnp.float32),
                "wo": s * jax.random.normal(ks[1], (HD, D), jnp.float32),   # final_linear
                "bo": jnp.zeros((1, D), jnp.float32),
            },
            "src_attn": {
                "wq": s * jax.random.normal(ks[2], (D, HD), jnp.float32),
                "bq": jnp.zeros((1, HD), jnp.float32),
                "wkv": s * jax.random.normal(ks[3], (D, 2 * HD), jnp.float32),
                "bkv": jnp.zeros((1, 2 * HD), jnp.float32),
                "wo": s * jax.random.normal(ks[4], (HD, D), jnp.float32),
                "bo": jnp.zeros((1, D), jnp.float32),
            },
            # reference PositionwiseFeedForward: both linears are d_model -> d_model
            "ffn_w1": s * jax.random.normal(ks[5], (D, D), jnp.float32),
            "ffn_b1": jnp.zeros((1, D), jnp.float32),
            "ffn_w2": s * jax.random.normal(ks[6], (D, D), jnp.float32),
            "ffn_b2": jnp.zeros((1, D), jnp.float32),
            "ln0_g": jnp.ones((1, D), jnp.float32), "ln0_b": jnp.zeros((1, D), jnp.float32),
            "ln1_g": jnp.ones((1, D), jnp.float32), "ln1_b": jnp.zeros((1, D), jnp.float32),
            "ln2_g": jnp.ones((1, D), jnp.float32), "ln2_b": jnp.zeros((1, D), jnp.float32),
        })
    # Decoder.norm exists in __init__ but is never applied in forward — kept for fidelity.
    final_norm = {"g": jnp.ones((1, D), jnp.float32), "b": jnp.zeros((1, D), jnp.float32)}
    return params, final_norm


# ----------------------------------- main ----------------------------------- #

if __name__ == "__main__":
    # TODO(synk): the image-side wrapper of VisualTransformerModel (pic2words /
    # unfold, start_token masking, words2pic / fold) is shape-inconsistent with
    # d_model in the reference (1024-dim patches vs d_model=256) and cannot run
    # as written; only the transformer decoder core is implemented here.
    B, T, S, D, H, N_LAYERS = 2, 8, 8, 32, 2, 2

    key = jax.random.PRNGKey(0)
    key, kx, km, kp = jax.random.split(key, 4)
    x = jax.random.normal(kx, (B, T, D), jnp.float32)        # decoder input tokens
    memory = jax.random.normal(km, (B, S, D), jnp.float32)   # encoder memory

    # Masks (0 = masked out, as in masked_fill(mask == 0, -1e9)):
    tgt_mask = jnp.broadcast_to(
        jnp.tril(jnp.ones((T, T), jnp.int32))[None, :, :], (B, T, T))
    src_mask = jnp.ones((B, T, S), jnp.int32)

    layer_params, _final_norm_unused = init_decoder_params(kp, N_LAYERS, D, H)

    fwd = jax.jit(lambda xx, mm, sm, tm, ps: decoder_forward(xx, mm, sm, tm, ps, H))
    out = fwd(x, memory, src_mask, tgt_mask, layer_params)
    jax.block_until_ready(out)

    assert out.shape == (B, T, D) and out.dtype == jnp.float32
    assert bool(jnp.all(jnp.isfinite(out)))
    print("KERNEL_OK")
</pallas_src>

<mosaic_0001>
module attributes {stable_mosaic.version = 11 : i64} {
  func.func @_ln_qkv_kernel(%arg0: i32, %arg1: memref<16x32xf32, #tpu.memory_space<vmem>>, %arg2: memref<1x32xf32, #tpu.memory_space<vmem>>, %arg3: memref<1x32xf32, #tpu.memory_space<vmem>>, %arg4: memref<32x192xf32, #tpu.memory_space<vmem>>, %arg5: memref<1x192xf32, #tpu.memory_space<vmem>>, %arg6: memref<16x64xf32, #tpu.memory_space<vmem>>, %arg7: memref<16x64xf32, #tpu.memory_space<vmem>>, %arg8: memref<16x64xf32, #tpu.memory_space<vmem>>) attributes {dimension_semantics = [#tpu.dimension_semantics<parallel>], iteration_bounds = array<i64: 1>, scalar_prefetch = 0 : i64, scratch_operands = 0 : i64, tpu.core_type = #tpu.core_type<tc>, window_params = [{transform_indices = @transform_0, window_bounds = array<i64: 16, 32>}, {pipeline_mode = #tpu.pipeline_mode<synchronous>, transform_indices = @transform_1, window_bounds = array<i64: 1, 32>}, {pipeline_mode = #tpu.pipeline_mode<synchronous>, transform_indices = @transform_2, window_bounds = array<i64: 1, 32>}, {pipeline_mode = #tpu.pipeline_mode<synchronous>, transform_indices = @transform_3, window_bounds = array<i64: 32, 192>}, {pipeline_mode = #tpu.pipeline_mode<synchronous>, transform_indices = @transform_4, window_bounds = array<i64: 1, 192>}, {transform_indices = @transform_5, window_bounds = array<i64: 16, 64>}, {transform_indices = @transform_6, window_bounds = array<i64: 16, 64>}, {transform_indices = @transform_7, window_bounds = array<i64: 16, 64>}]} {
    %c0 = arith.constant 0 : index
    %c0_0 = arith.constant 0 : index
    %0 = vector.load %arg1[%c0, %c0_0] : memref<16x32xf32, #tpu.memory_space<vmem>>, vector<16x32xf32>
    %c0_1 = arith.constant 0 : index
    %c0_2 = arith.constant 0 : index
    %1 = vector.load %arg2[%c0_1, %c0_2] : memref<1x32xf32, #tpu.memory_space<vmem>>, vector<1x32xf32>
    %c0_3 = arith.constant 0 : index
    %c0_4 = arith.constant 0 : index
    %2 = vector.load %arg3[%c0_3, %c0_4] : memref<1x32xf32, #tpu.memory_space<vmem>>, vector<1x32xf32>
    %cst = arith.constant dense<0.000000e+00> : vector<16xf32>
    %3 = vector.multi_reduction <add>, %0, %cst [1] : vector<16x32xf32> to vector<16xf32>
    %4 = vector.shape_cast %3 : vector<16xf32> to vector<16x1xf32>
    %cst_5 = arith.constant 3.200000e+01 : f32
    %5 = vector.broadcast %cst_5 : f32 to vector<16x1xf32>
    %6 = arith.divf %4, %5 : vector<16x1xf32>
    %7 = vector.broadcast %6 : vector<16x1xf32> to vector<16x32xf32>
    %8 = arith.subf %0, %7 : vector<16x32xf32>
    %9 = arith.mulf %8, %8 : vector<16x32xf32>
    %cst_6 = arith.constant dense<0.000000e+00> : vector<16xf32>
    %10 = vector.multi_reduction <add>, %9, %cst_6 [1] : vector<16x32xf32> to vector<16xf32>
    %11 = vector.shape_cast %10 : vector<16xf32> to vector<16x1xf32>
    %cst_7 = arith.constant 3.100000e+01 : f32
    %12 = vector.broadcast %cst_7 : f32 to vector<16x1xf32>
    %13 = arith.divf %11, %12 : vector<16x1xf32>
    %14 = math.sqrt %13 : vector<16x1xf32>
    %15 = vector.broadcast %1 : vector<1x32xf32> to vector<16x32xf32>
    %16 = arith.mulf %15, %8 : vector<16x32xf32>
    %cst_8 = arith.constant 9.99999997E-7 : f32
    %17 = vector.broadcast %cst_8 : f32 to vector<16x1xf32>
    %18 = arith.addf %14, %17 : vector<16x1xf32>
    %19 = vector.broadcast %18 : vector<16x1xf32> to vector<16x32xf32>
    %20 = arith.divf %16, %19 : vector<16x32xf32>
    %21 = vector.broadcast %2 : vector<1x32xf32> to vector<16x32xf32>
    %22 = arith.addf %20, %21 : vector<16x32xf32>
    %c0_9 = arith.constant 0 : index
    %c0_10 = arith.constant 0 : index
    %23 = vector.load %arg4[%c0_9, %c0_10] : memref<32x192xf32, #tpu.memory_space<vmem>>, vector<32x192xf32>
    %cst_11 = arith.constant dense<0.000000e+00> : vector<16x192xf32>
    %24 = tpu.matmul %22, %23, %cst_11 {dimension_numbers = #tpu.dot_dimension_numbers<[1], [0], [0], [1], [0, 0, 1, 1], [], []>} : vector<16x32xf32>, vector<32x192xf32>, vector<16x192xf32> -> vector<16x192xf32>
    %c0_12 = arith.constant 0 : index
    %c0_13 = arith.constant 0 : index
    %25 = vector.load %arg5[%c0_12, %c0_13] : memref<1x192xf32, #tpu.memory_space<vmem>>, vector<1x192xf32>
    %26 = vector.broadcast %25 : vector<1x192xf32> to vector<16x192xf32>
    %27 = arith.addf %24, %26 : vector<16x192xf32>
    %28 = vector.extract_strided_slice %27 {offsets = [0, 0], sizes = [16, 64], strides = [1, 1]} : vector<16x192xf32> to vector<16x64xf32>
    %c0_14 = arith.constant 0 : index
    %c0_15 = arith.constant 0 : index
    %29 = vector.load %arg6[%c0_14, %c0_15] : memref<16x64xf32, #tpu.memory_space<vmem>>, vector<16x64xf32>
    tpu.vector_store %arg6[%c0_14, %c0_15], %28 {strides = array<i32>} : memref<16x64xf32, #tpu.memory_space<vmem>>, vector<16x64xf32>,
    %30 = vector.extract_strided_slice %27 {offsets = [0, 64], sizes = [16, 64], strides = [1, 1]} : vector<16x192xf32> to vector<16x64xf32>
    %c0_16 = arith.constant 0 : index
    %c0_17 = arith.constant 0 : index
    %31 = vector.load %arg7[%c0_16, %c0_17] : memref<16x64xf32, #tpu.memory_space<vmem>>, vector<16x64xf32>
    tpu.vector_store %arg7[%c0_16, %c0_17], %30 {strides = array<i32>} : memref<16x64xf32, #tpu.memory_space<vmem>>, vector<16x64xf32>,
    %32 = vector.extract_strided_slice %27 {offsets = [0, 128], sizes = [16, 64], strides = [1, 1]} : vector<16x192xf32> to vector<16x64xf32>
    %c0_18 = arith.constant 0 : index
    %c0_19 = arith.constant 0 : index
    %33 = vector.load %arg8[%c0_18, %c0_19] : memref<16x64xf32, #tpu.memory_space<vmem>>, vector<16x64xf32>
    tpu.vector_store %arg8[%c0_18, %c0_19], %32 {strides = array<i32>} : memref<16x64xf32, #tpu.memory_space<vmem>>, vector<16x64xf32>,
    return
  }
  func.func @transform_0(%arg0: i32) -> (i32, i32) {
    %c0_i32 = arith.constant 0 : i32
    %c0_i32_0 = arith.constant 0 : i32
    return %arg0, %c0_i32 : i32, i32
  }
  func.func @transform_1(%arg0: i32) -> (i32, i32) {
    %c0_i32 = arith.constant 0 : i32
    %c0_i32_0 = arith.constant 0 : i32
    %c0_i32_1 = arith.constant 0 : i32
    return %c0_i32, %c0_i32_0 : i32, i32
  }
  func.func @transform_2(%arg0: i32) -> (i32, i32) {
    %c0_i32 = arith.constant 0 : i32
    %c0_i32_0 = arith.constant 0 : i32
    %c0_i32_1 = arith.constant 0 : i32
    return %c0_i32, %c0_i32_0 : i32, i32
  }
  func.func @transform_3(%arg0: i32) -> (i32, i32) {
    %c0_i32 = arith.constant 0 : i32
    %c0_i32_0 = arith.constant 0 : i32
    %c0_i32_1 = arith.constant 0 : i32
    return %c0_i32, %c0_i32_0 : i32, i32
  }
  func.func @transform_4(%arg0: i32) -> (i32, i32) {
    %c0_i32 = arith.constant 0 : i32
    %c0_i32_0 = arith.constant 0 : i32
    %c0_i32_1 = arith.constant 0 : i32
    return %c0_i32, %c0_i32_0 : i32, i32
  }
  func.func @transform_5(%arg0: i32) -> (i32, i32) {
    %c0_i32 = arith.constant 0 : i32
    %c0_i32_0 = arith.constant 0 : i32
    return %arg0, %c0_i32 : i32, i32
  }
  func.func @transform_6(%arg0: i32) -> (i32, i32) {
    %c0_i32 = arith.constant 0 : i32
    %c0_i32_0 = arith.constant 0 : i32
    return %arg0, %c0_i32 : i32, i32
  }
  func.func @transform_7(%arg0: i32) -> (i32, i32) {
    %c0_i32 = arith.constant 0 : i32
    %c0_i32_0 = arith.constant 0 : i32
    return %arg0, %c0_i32 : i32, i32
  }
}

module attributes {stable_mosaic.version = 11 : i64} {
  func.func @_mha_kernel(%arg0: i32, %arg1: memref<1x8x64xf32, #tpu.memory_space<vmem>>, %arg2: memref<1x8x64xf32, #tpu.memory_space<vmem>>, %arg3: memref<1x8x64xf32, #tpu.memory_space<vmem>>, %arg4: memref<1x8x8xi32, #tpu.memory_space<vmem>>, %arg5: memref<1x8x64xf32, #tpu.memory_space<vmem>>) attributes {dimension_semantics = [#tpu.dimension_semantics<parallel>], iteration_bounds = array<i64: 2>, scalar_prefetch = 0 : i64, scratch_operands = 0 : i64, tpu.core_type = #tpu.core_type<tc>, window_params = [{transform_indices = @transform_0, window_bounds = array<i64: 1, 8, 64>}, {transform_indices = @transform_1, window_bounds = array<i64: 1, 8, 64>}, {transform_indices = @transform_2, window_bounds = array<i64: 1, 8, 64>}, {transform_indices = @transform_3, window_bounds = array<i64: 1, 8, 8>}, {transform_indices = @transform_4, window_bounds = array<i64: 1, 8, 64>}]} {
    %c0 = arith.constant 0 : index
    %c0_0 = arith.constant 0 : index
    %c0_1 = arith.constant 0 : index
    %0 = vector.load %arg1[%c0, %c0_0, %c0_1] : memref<1x8x64xf32, #tpu.memory_space<vmem>>, vector<1x8x64xf32>
    %1 = vector.shape_cast %0 : vector<1x8x64xf32> to vector<8x64xf32>
    %c0_2 = arith.constant 0 : index
    %c0_3 = arith.constant 0 : index
    %c0_4 = arith.constant 0 : index
    %2 = vector.load %arg2[%c0_2, %c0_3, %c0_4] : memref<1x8x64xf32, #tpu.memory_space<vmem>>, vector<1x8x64xf32>
    %3 = vector.shape_cast %2 : vector<1x8x64xf32> to vector<8x64xf32>
    %c0_5 = arith.constant 0 : index
    %c0_6 = arith.constant 0 : index
    %c0_7 = arith.constant 0 : index
    %4 = vector.load %arg3[%c0_5, %c0_6, %c0_7] : memref<1x8x64xf32, #tpu.memory_space<vmem>>, vector<1x8x64xf32>
    %5 = vector.shape_cast %4 : vector<1x8x64xf32> to vector<8x64xf32>
    %c0_8 = arith.constant 0 : index
    %c0_9 = arith.constant 0 : index
    %c0_10 = arith.constant 0 : index
    %6 = vector.load %arg4[%c0_8, %c0_9, %c0_10] : memref<1x8x8xi32, #tpu.memory_space<vmem>>, vector<1x8x8xi32>
    %7 = vector.shape_cast %6 : vector<1x8x8xi32> to vector<8x8xi32>
    %c0_i32 = arith.constant 0 : i32
    %8 = vector.broadcast %c0_i32 : i32 to vector<8x8xi32>
    %9 = arith.cmpi eq, %7, %8 : vector<8x8xi32>
    %10 = vector.extract_strided_slice %1 {offsets = [0, 0], sizes = [8, 32], strides = [1, 1]} : vector<8x64xf32> to vector<8x32xf32>
    %11 = vector.extract_strided_slice %3 {offsets = [0, 0], sizes = [8, 32], strides = [1, 1]} : vector<8x64xf32> to vector<8x32xf32>
    %12 = tpu.transpose %11, [1, 0] : vector<8x32xf32> -> vector<32x8xf32>
    %cst = arith.constant dense<0.000000e+00> : vector<8x8xf32>
    %13 = tpu.matmul %10, %12, %cst {dimension_numbers = #tpu.dot_dimension_numbers<[1], [0], [0], [1], [0, 0, 1, 1], [], []>} : vector<8x32xf32>, vector<32x8xf32>, vector<8x8xf32> -> vector<8x8xf32>
    %cst_11 = arith.constant 0.176776692 : f32
    %14 = vector.broadcast %cst_11 : f32 to vector<8x8xf32>
    %15 = arith.mulf %13, %14 : vector<8x8xf32>
    %cst_12 = arith.constant -1.000000e+09 : f32
    %16 = vector.broadcast %cst_12 : f32 to vector<8x8xf32>
    %17 = arith.select %9, %16, %15 : vector<8x8xi1>, vector<8x8xf32>
    %cst_13 = arith.constant dense<0xFF800000> : vector<8xf32>
    %18 = vector.multi_reduction <maximumf>, %17, %cst_13 [1] : vector<8x8xf32> to vector<8xf32>
    %19 = vector.shape_cast %18 : vector<8xf32> to vector<8x1xf32>
    %20 = vector.broadcast %19 : vector<8x1xf32> to vector<8x8xf32>
    %21 = arith.subf %17, %20 : vector<8x8xf32>
    %22 = math.exp %21 : vector<8x8xf32>
    %cst_14 = arith.constant dense<0.000000e+00> : vector<8xf32>
    %23 = vector.multi_reduction <add>, %22, %cst_14 [1] : vector<8x8xf32> to vector<8xf32>
    %24 = vector.shape_cast %23 : vector<8xf32> to vector<8x1xf32>
    %25 = tpu.reciprocal %24 {approx = true} : vector<8x1xf32> -> vector<8x1xf32>
    %26 = vector.broadcast %25 : vector<8x1xf32> to vector<8x8xf32>
    %27 = arith.mulf %22, %26 : vector<8x8xf32>
    %28 = vector.extract_strided_slice %5 {offsets = [0, 0], sizes = [8, 32], strides = [1, 1]} : vector<8x64xf32> to vector<8x32xf32>
    %cst_15 = arith.constant dense<0.000000e+00> : vector<8x32xf32>
    %29 = tpu.matmul %27, %28, %cst_15 {dimension_numbers = #tpu.dot_dimension_numbers<[1], [0], [0], [1], [0, 0, 1, 1], [], []>} : vector<8x8xf32>, vector<8x32xf32>, vector<8x32xf32> -> vector<8x32xf32>
    %30 = vector.extract_strided_slice %1 {offsets = [0, 32], sizes = [8, 32], strides = [1, 1]} : vector<8x64xf32> to vector<8x32xf32>
    %31 = vector.extract_strided_slice %3 {offsets = [0, 32], sizes = [8, 32], strides = [1, 1]} : vector<8x64xf32> to vector<8x32xf32>
    %32 = tpu.transpose %31, [1, 0] : vector<8x32xf32> -> vector<32x8xf32>
    %cst_16 = arith.constant dense<0.000000e+00> : vector<8x8xf32>
    %33 = tpu.matmul %30, %32, %cst_16 {dimension_numbers = #tpu.dot_dimension_numbers<[1], [0], [0], [1], [0, 0, 1, 1], [], []>} : vector<8x32xf32>, vector<32x8xf32>, vector<8x8xf32> -> vector<8x8xf32>
    %cst_17 = arith.constant 0.176776692 : f32
    %34 = vector.broadcast %cst_17 : f32 to vector<8x8xf32>
    %35 = arith.mulf %33, %34 : vector<8x8xf32>
    %cst_18 = arith.constant -1.000000e+09 : f32
    %36 = vector.broadcast %cst_18 : f32 to vector<8x8xf32>
    %37 = arith.select %9, %36, %35 : vector<8x8xi1>, vector<8x8xf32>
    %cst_19 = arith.constant dense<0xFF800000> : vector<8xf32>
    %38 = vector.multi_reduction <maximumf>, %37, %cst_19 [1] : vector<8x8xf32> to vector<8xf32>
    %39 = vector.shape_cast %38 : vector<8xf32> to vector<8x1xf32>
    %40 = vector.broadcast %39 : vector<8x1xf32> to vector<8x8xf32>
    %41 = arith.subf %37, %40 : vector<8x8xf32>
    %42 = math.exp %41 : vector<8x8xf32>
    %cst_20 = arith.constant dense<0.000000e+00> : vector<8xf32>
    %43 = vector.multi_reduction <add>, %42, %cst_20 [1] : vector<8x8xf32> to vector<8xf32>
    %44 = vector.shape_cast %43 : vector<8xf32> to vector<8x1xf32>
    %45 = tpu.reciprocal %44 {approx = true} : vector<8x1xf32> -> vector<8x1xf32>
    %46 = vector.broadcast %45 : vector<8x1xf32> to vector<8x8xf32>
    %47 = arith.mulf %42, %46 : vector<8x8xf32>
    %48 = vector.extract_strided_slice %5 {offsets = [0, 32], sizes = [8, 32], strides = [1, 1]} : vector<8x64xf32> to vector<8x32xf32>
    %cst_21 = arith.constant dense<0.000000e+00> : vector<8x32xf32>
    %49 = tpu.matmul %47, %48, %cst_21 {dimension_numbers = #tpu.dot_dimension_numbers<[1], [0], [0], [1], [0, 0, 1, 1], [], []>} : vector<8x8xf32>, vector<8x32xf32>, vector<8x32xf32> -> vector<8x32xf32>
    %50 = tpu.concatenate %29, %49 in 1 : vector<8x32xf32>, vector<8x32xf32> -> vector<8x64xf32>
    %c0_22 = arith.constant 0 : index
    %c0_23 = arith.constant 0 : index
    %c0_24 = arith.constant 0 : index
    %51 = vector.load %arg5[%c0_22, %c0_23, %c0_24] : memref<1x8x64xf32, #tpu.memory_space<vmem>>, vector<1x8x64xf32>
    %52 = vector.shape_cast %51 : vector<1x8x64xf32> to vector<8x64xf32>
    %53 = vector.shape_cast %50 : vector<8x64xf32> to vector<1x8x64xf32>
    tpu.vector_store %arg5[%c0_22, %c0_23, %c0_24], %53 {strides = array<i32>} : memref<1x8x64xf32, #tpu.memory_space<vmem>>, vector<1x8x64xf32>,
    return
  }
  func.func @transform_0(%arg0: i32) -> (i32, i32, i32) {
    %c0_i32 = arith.constant 0 : i32
    %c0_i32_0 = arith.constant 0 : i32
    %c0_i32_1 = arith.constant 0 : i32
    return %arg0, %c0_i32, %c0_i32_0 : i32, i32, i32
  }
  func.func @transform_1(%arg0: i32) -> (i32, i32, i32) {
    %c0_i32 = arith.constant 0 : i32
    %c0_i32_0 = arith.constant 0 : i32
    %c0_i32_1 = arith.constant 0 : i32
    return %arg0, %c0_i32, %c0_i32_0 : i32, i32, i32
  }
  func.func @transform_2(%arg0: i32) -> (i32, i32, i32) {
    %c0_i32 = arith.constant 0 : i32
    %c0_i32_0 = arith.constant 0 : i32
    %c0_i32_1 = arith.constant 0 : i32
    return %arg0, %c0_i32, %c0_i32_0 : i32, i32, i32
  }
  func.func @transform_3(%arg0: i32) -> (i32, i32, i32) {
    %c0_i32 = arith.constant 0 : i32
    %c0_i32_0 = arith.constant 0 : i32
    %c0_i32_1 = arith.constant 0 : i32
    return %arg0, %c0_i32, %c0_i32_0 : i32, i32, i32
  }
  func.func @transform_4(%arg0: i32) -> (i32, i32, i32) {
    %c0_i32 = arith.constant 0 : i32
    %c0_i32_0 = arith.constant 0 : i32
    %c0_i32_1 = arith.constant 0 : i32
    return %arg0, %c0_i32, %c0_i32_0 : i32, i32, i32
  }
}

module attributes {stable_mosaic.version = 11 : i64} {
  func.func @_linear_residual_kernel(%arg0: i32, %arg1: memref<16x64xf32, #tpu.memory_space<vmem>>, %arg2: memref<16x32xf32, #tpu.memory_space<vmem>>, %arg3: memref<64x32xf32, #tpu.memory_space<vmem>>, %arg4: memref<1x32xf32, #tpu.memory_space<vmem>>, %arg5: memref<16x32xf32, #tpu.memory_space<vmem>>) attributes {dimension_semantics = [#tpu.dimension_semantics<parallel>], iteration_bounds = array<i64: 1>, scalar_prefetch = 0 : i64, scratch_operands = 0 : i64, tpu.core_type = #tpu.core_type<tc>, window_params = [{transform_indices = @transform_0, window_bounds = array<i64: 16, 64>}, {transform_indices = @transform_1, window_bounds = array<i64: 16, 32>}, {pipeline_mode = #tpu.pipeline_mode<synchronous>, transform_indices = @transform_2, window_bounds = array<i64: 64, 32>}, {pipeline_mode = #tpu.pipeline_mode<synchronous>, transform_indices = @transform_3, window_bounds = array<i64: 1, 32>}, {transform_indices = @transform_4, window_bounds = array<i64: 16, 32>}]} {
    %c0 = arith.constant 0 : index
    %c0_0 = arith.constant 0 : index
    %0 = vector.load %arg1[%c0, %c0_0] : memref<16x64xf32, #tpu.memory_space<vmem>>, vector<16x64xf32>
    %c0_1 = arith.constant 0 : index
    %c0_2 = arith.constant 0 : index
    %1 = vector.load %arg3[%c0_1, %c0_2] : memref<64x32xf32, #tpu.memory_space<vmem>>, vector<64x32xf32>
    %cst = arith.constant dense<0.000000e+00> : vector<16x32xf32>
    %2 = tpu.matmul %0, %1, %cst {dimension_numbers = #tpu.dot_dimension_numbers<[1], [0], [0], [1], [0, 0, 1, 1], [], []>} : vector<16x64xf32>, vector<64x32xf32>, vector<16x32xf32> -> vector<16x32xf32>
    %c0_3 = arith.constant 0 : index
    %c0_4 = arith.constant 0 : index
    %3 = vector.load %arg4[%c0_3, %c0_4] : memref<1x32xf32, #tpu.memory_space<vmem>>, vector<1x32xf32>
    %4 = vector.broadcast %3 : vector<1x32xf32> to vector<16x32xf32>
    %5 = arith.addf %2, %4 : vector<16x32xf32>
    %c0_5 = arith.constant 0 : index
    %c0_6 = arith.constant 0 : index
    %6 = vector.load %arg2[%c0_5, %c0_6] : memref<16x32xf32, #tpu.memory_space<vmem>>, vector<16x32xf32>
    %7 = arith.addf %5, %6 : vector<16x32xf32>
    %c0_7 = arith.constant 0 : index
    %c0_8 = arith.constant 0 : index
    %8 = vector.load %arg5[%c0_7, %c0_8] : memref<16x32xf32, #tpu.memory_space<vmem>>, vector<16x32xf32>
    tpu.vector_store %arg5[%c0_7, %c0_8], %7 {strides = array<i32>} : memref<16x32xf32, #tpu.memory_space<vmem>>, vector<16x32xf32>,
    return
  }
  func.func @transform_0(%arg0: i32) -> (i32, i32) {
    %c0_i32 = arith.constant 0 : i32
    %c0_i32_0 = arith.constant 0 : i32
    return %arg0, %c0_i32 : i32, i32
  }
  func.func @transform_1(%arg0: i32) -> (i32, i32) {
    %c0_i32 = arith.constant 0 : i32
    %c0_i32_0 = arith.constant 0 : i32
    return %arg0, %c0_i32 : i32, i32
  }
  func.func @transform_2(%arg0: i32) -> (i32, i32) {
    %c0_i32 = arith.constant 0 : i32
    %c0_i32_0 = arith.constant 0 : i32
    %c0_i32_1 = arith.constant 0 : i32
    return %c0_i32, %c0_i32_0 : i32, i32
  }
  func.func @transform_3(%arg0: i32) -> (i32, i32) {
    %c0_i32 = arith.constant 0 : i32
    %c0_i32_0 = arith.constant 0 : i32
    %c0_i32_1 = arith.constant 0 : i32
    return %c0_i32, %c0_i32_0 : i32, i32
  }
  func.func @transform_4(%arg0: i32) -> (i32, i32) {
    %c0_i32 = arith.constant 0 : i32
    %c0_i32_0 = arith.constant 0 : i32
    return %arg0, %c0_i32 : i32, i32
  }
}

module attributes {stable_mosaic.version = 11 : i64} {
  func.func @_ln_linear_kernel(%arg0: i32, %arg1: memref<16x32xf32, #tpu.memory_space<vmem>>, %arg2: memref<1x32xf32, #tpu.memory_space<vmem>>, %arg3: memref<1x32xf32, #tpu.memory_space<vmem>>, %arg4: memref<32x64xf32, #tpu.memory_space<vmem>>, %arg5: memref<1x64xf32, #tpu.memory_space<vmem>>, %arg6: memref<16x64xf32, #tpu.memory_space<vmem>>) attributes {dimension_semantics = [#tpu.dimension_semantics<parallel>], iteration_bounds = array<i64: 1>, scalar_prefetch = 0 : i64, scratch_operands = 0 : i64, tpu.core_type = #tpu.core_type<tc>, window_params = [{transform_indices = @transform_0, window_bounds = array<i64: 16, 32>}, {pipeline_mode = #tpu.pipeline_mode<synchronous>, transform_indices = @transform_1, window_bounds = array<i64: 1, 32>}, {pipeline_mode = #tpu.pipeline_mode<synchronous>, transform_indices = @transform_2, window_bounds = array<i64: 1, 32>}, {pipeline_mode = #tpu.pipeline_mode<synchronous>, transform_indices = @transform_3, window_bounds = array<i64: 32, 64>}, {pipeline_mode = #tpu.pipeline_mode<synchronous>, transform_indices = @transform_4, window_bounds = array<i64: 1, 64>}, {transform_indices = @transform_5, window_bounds = array<i64: 16, 64>}]} {
    %c0 = arith.constant 0 : index
    %c0_0 = arith.constant 0 : index
    %0 = vector.load %arg1[%c0, %c0_0] : memref<16x32xf32, #tpu.memory_space<vmem>>, vector<16x32xf32>
    %c0_1 = arith.constant 0 : index
    %c0_2 = arith.constant 0 : index
    %1 = vector.load %arg2[%c0_1, %c0_2] : memref<1x32xf32, #tpu.memory_space<vmem>>, vector<1x32xf32>
    %c0_3 = arith.constant 0 : index
    %c0_4 = arith.constant 0 : index
    %2 = vector.load %arg3[%c0_3, %c0_4] : memref<1x32xf32, #tpu.memory_space<vmem>>, vector<1x32xf32>
    %cst = arith.constant dense<0.000000e+00> : vector<16xf32>
    %3 = vector.multi_reduction <add>, %0, %cst [1] : vector<16x32xf32> to vector<16xf32>
    %4 = vector.shape_cast %3 : vector<16xf32> to vector<16x1xf32>
    %cst_5 = arith.constant 3.200000e+01 : f32
    %5 = vector.broadcast %cst_5 : f32 to vector<16x1xf32>
    %6 = arith.divf %4, %5 : vector<16x1xf32>
    %7 = vector.broadcast %6 : vector<16x1xf32> to vector<16x32xf32>
    %8 = arith.subf %0, %7 : vector<16x32xf32>
    %9 = arith.mulf %8, %8 : vector<16x32xf32>
    %cst_6 = arith.constant dense<0.000000e+00> : vector<16xf32>
    %10 = vector.multi_reduction <add>, %9, %cst_6 [1] : vector<16x32xf32> to vector<16xf32>
    %11 = vector.shape_cast %10 : vector<16xf32> to vector<16x1xf32>
    %cst_7 = arith.constant 3.100000e+01 : f32
    %12 = vector.broadcast %cst_7 : f32 to vector<16x1xf32>
    %13 = arith.divf %11, %12 : vector<16x1xf32>
    %14 = math.sqrt %13 : vector<16x1xf32>
    %15 = vector.broadcast %1 : vector<1x32xf32> to vector<16x32xf32>
    %16 = arith.mulf %15, %8 : vector<16x32xf32>
    %cst_8 = arith.constant 9.99999997E-7 : f32
    %17 = vector.broadcast %cst_8 : f32 to vector<16x1xf32>
    %18 = arith.addf %14, %17 : vector<16x1xf32>
    %19 = vector.broadcast %18 : vector<16x1xf32> to vector<16x32xf32>
    %20 = arith.divf %16, %19 : vector<16x32xf32>
    %21 = vector.broadcast %2 : vector<1x32xf32> to vector<16x32xf32>
    %22 = arith.addf %20, %21 : vector<16x32xf32>
    %c0_9 = arith.constant 0 : index
    %c0_10 = arith.constant 0 : index
    %23 = vector.load %arg4[%c0_9, %c0_10] : memref<32x64xf32, #tpu.memory_space<vmem>>, vector<32x64xf32>
    %cst_11 = arith.constant dense<0.000000e+00> : vector<16x64xf32>
    %24 = tpu.matmul %22, %23, %cst_11 {dimension_numbers = #tpu.dot_dimension_numbers<[1], [0], [0], [1], [0, 0, 1, 1], [], []>} : vector<16x32xf32>, vector<32x64xf32>, vector<16x64xf32> -> vector<16x64xf32>
    %c0_12 = arith.constant 0 : index
    %c0_13 = arith.constant 0 : index
    %25 = vector.load %arg5[%c0_12, %c0_13] : memref<1x64xf32, #tpu.memory_space<vmem>>, vector<1x64xf32>
    %26 = vector.broadcast %25 : vector<1x64xf32> to vector<16x64xf32>
    %27 = arith.addf %24, %26 : vector<16x64xf32>
    %c0_14 = arith.constant 0 : index
    %c0_15 = arith.constant 0 : index
    %28 = vector.load %arg6[%c0_14, %c0_15] : memref<16x64xf32, #tpu.memory_space<vmem>>, vector<16x64xf32>
    tpu.vector_store %arg6[%c0_14, %c0_15], %27 {strides = array<i32>} : memref<16x64xf32, #tpu.memory_space<vmem>>, vector<16x64xf32>,
    return
  }
  func.func @transform_0(%arg0: i32) -> (i32, i32) {
    %c0_i32 = arith.constant 0 : i32
    %c0_i32_0 = arith.constant 0 : i32
    return %arg0, %c0_i32 : i32, i32
  }
  func.func @transform_1(%arg0: i32) -> (i32, i32) {
    %c0_i32 = arith.constant 0 : i32
    %c0_i32_0 = arith.constant 0 : i32
    %c0_i32_1 = arith.constant 0 : i32
    return %c0_i32, %c0_i32_0 : i32, i32
  }
  func.func @transform_2(%arg0: i32) -> (i32, i32) {
    %c0_i32 = arith.constant 0 : i32
    %c0_i32_0 = arith.constant 0 : i32
    %c0_i32_1 = arith.constant 0 : i32
    return %c0_i32, %c0_i32_0 : i32, i32
  }
  func.func @transform_3(%arg0: i32) -> (i32, i32) {
    %c0_i32 = arith.constant 0 : i32
    %c0_i32_0 = arith.constant 0 : i32
    %c0_i32_1 = arith.constant 0 : i32
    return %c0_i32, %c0_i32_0 : i32, i32
  }
  func.func @transform_4(%arg0: i32) -> (i32, i32) {
    %c0_i32 = arith.constant 0 : i32
    %c0_i32_0 = arith.constant 0 : i32
    %c0_i32_1 = arith.constant 0 : i32
    return %c0_i32, %c0_i32_0 : i32, i32
  }
  func.func @transform_5(%arg0: i32) -> (i32, i32) {
    %c0_i32 = arith.constant 0 : i32
    %c0_i32_0 = arith.constant 0 : i32
    return %arg0, %c0_i32 : i32, i32
  }
}

module attributes {stable_mosaic.version = 11 : i64} {
  func.func @_linear_split2_kernel(%arg0: i32, %arg1: memref<16x32xf32, #tpu.memory_space<vmem>>, %arg2: memref<32x128xf32, #tpu.memory_space<vmem>>, %arg3: memref<1x128xf32, #tpu.memory_space<vmem>>, %arg4: memref<16x64xf32, #tpu.memory_space<vmem>>, %arg5: memref<16x64xf32, #tpu.memory_space<vmem>>) attributes {dimension_semantics = [#tpu.dimension_semantics<parallel>], iteration_bounds = array<i64: 1>, scalar_prefetch = 0 : i64, scratch_operands = 0 : i64, tpu.core_type = #tpu.core_type<tc>, window_params = [{transform_indices = @transform_0, window_bounds = array<i64: 16, 32>}, {pipeline_mode = #tpu.pipeline_mode<synchronous>, transform_indices = @transform_1, window_bounds = array<i64: 32, 128>}, {pipeline_mode = #tpu.pipeline_mode<synchronous>, transform_indices = @transform_2, window_bounds = array<i64: 1, 128>}, {transform_indices = @transform_3, window_bounds = array<i64: 16, 64>}, {transform_indices = @transform_4, window_bounds = array<i64: 16, 64>}]} {
    %c0 = arith.constant 0 : index
    %c0_0 = arith.constant 0 : index
    %0 = vector.load %arg1[%c0, %c0_0] : memref<16x32xf32, #tpu.memory_space<vmem>>, vector<16x32xf32>
    %c0_1 = arith.constant 0 : index
    %c0_2 = arith.constant 0 : index
    %1 = vector.load %arg2[%c0_1, %c0_2] : memref<32x128xf32, #tpu.memory_space<vmem>>, vector<32x128xf32>
    %cst = arith.constant dense<0.000000e+00> : vector<16x128xf32>
    %2 = tpu.matmul %0, %1, %cst {dimension_numbers = #tpu.dot_dimension_numbers<[1], [0], [0], [1], [0, 0, 1, 1], [], []>} : vector<16x32xf32>, vector<32x128xf32>, vector<16x128xf32> -> vector<16x128xf32>
    %c0_3 = arith.constant 0 : index
    %c0_4 = arith.constant 0 : index
    %3 = vector.load %arg3[%c0_3, %c0_4] : memref<1x128xf32, #tpu.memory_space<vmem>>, vector<1x128xf32>
    %4 = vector.broadcast %3 : vector<1x128xf32> to vector<16x128xf32>
    %5 = arith.addf %2, %4 : vector<16x128xf32>
    %6 = vector.extract_strided_slice %5 {offsets = [0, 0], sizes = [16, 64], strides = [1, 1]} : vector<16x128xf32> to vector<16x64xf32>
    %c0_5 = arith.constant 0 : index
    %c0_6 = arith.constant 0 : index
    %7 = vector.load %arg4[%c0_5, %c0_6] : memref<16x64xf32, #tpu.memory_space<vmem>>, vector<16x64xf32>
    tpu.vector_store %arg4[%c0_5, %c0_6], %6 {strides = array<i32>} : memref<16x64xf32, #tpu.memory_space<vmem>>, vector<16x64xf32>,
    %8 = vector.extract_strided_slice %5 {offsets = [0, 64], sizes = [16, 64], strides = [1, 1]} : vector<16x128xf32> to vector<16x64xf32>
    %c0_7 = arith.constant 0 : index
    %c0_8 = arith.constant 0 : index
    %9 = vector.load %arg5[%c0_7, %c0_8] : memref<16x64xf32, #tpu.memory_space<vmem>>, vector<16x64xf32>
    tpu.vector_store %arg5[%c0_7, %c0_8], %8 {strides = array<i32>} : memref<16x64xf32, #tpu.memory_space<vmem>>, vector<16x64xf32>,
    return
  }
  func.func @transform_0(%arg0: i32) -> (i32, i32) {
    %c0_i32 = arith.constant 0 : i32
    %c0_i32_0 = arith.constant 0 : i32
    return %arg0, %c0_i32 : i32, i32
  }
  func.func @transform_1(%arg0: i32) -> (i32, i32) {
    %c0_i32 = arith.constant 0 : i32
    %c0_i32_0 = arith.constant 0 : i32
    %c0_i32_1 = arith.constant 0 : i32
    return %c0_i32, %c0_i32_0 : i32, i32
  }
  func.func @transform_2(%arg0: i32) -> (i32, i32) {
    %c0_i32 = arith.constant 0 : i32
    %c0_i32_0 = arith.constant 0 : i32
    %c0_i32_1 = arith.constant 0 : i32
    return %c0_i32, %c0_i32_0 : i32, i32
  }
  func.func @transform_3(%arg0: i32) -> (i32, i32) {
    %c0_i32 = arith.constant 0 : i32
    %c0_i32_0 = arith.constant 0 : i32
    return %arg0, %c0_i32 : i32, i32
  }
  func.func @transform_4(%arg0: i32) -> (i32, i32) {
    %c0_i32 = arith.constant 0 : i32
    %c0_i32_0 = arith.constant 0 : i32
    return %arg0, %c0_i32 : i32, i32
  }
}

module attributes {stable_mosaic.version = 11 : i64} {
  func.func @_ffn_kernel(%arg0: i32, %arg1: memref<16x32xf32, #tpu.memory_space<vmem>>, %arg2: memref<1x32xf32, #tpu.memory_space<vmem>>, %arg3: memref<1x32xf32, #tpu.memory_space<vmem>>, %arg4: memref<32x32xf32, #tpu.memory_space<vmem>>, %arg5: memref<1x32xf32, #tpu.memory_space<vmem>>, %arg6: memref<32x32xf32, #tpu.memory_space<vmem>>, %arg7: memref<1x32xf32, #tpu.memory_space<vmem>>, %arg8: memref<16x32xf32, #tpu.memory_space<vmem>>) attributes {dimension_semantics = [#tpu.dimension_semantics<parallel>], iteration_bounds = array<i64: 1>, scalar_prefetch = 0 : i64, scratch_operands = 0 : i64, tpu.core_type = #tpu.core_type<tc>, window_params = [{transform_indices = @transform_0, window_bounds = array<i64: 16, 32>}, {pipeline_mode = #tpu.pipeline_mode<synchronous>, transform_indices = @transform_1, window_bounds = array<i64: 1, 32>}, {pipeline_mode = #tpu.pipeline_mode<synchronous>, transform_indices = @transform_2, window_bounds = array<i64: 1, 32>}, {pipeline_mode = #tpu.pipeline_mode<synchronous>, transform_indices = @transform_3, window_bounds = array<i64: 32, 32>}, {pipeline_mode = #tpu.pipeline_mode<synchronous>, transform_indices = @transform_4, window_bounds = array<i64: 1, 32>}, {pipeline_mode = #tpu.pipeline_mode<synchronous>, transform_indices = @transform_5, window_bounds = array<i64: 32, 32>}, {pipeline_mode = #tpu.pipeline_mode<synchronous>, transform_indices = @transform_6, window_bounds = array<i64: 1, 32>}, {transform_indices = @transform_7, window_bounds = array<i64: 16, 32>}]} {
    %c0 = arith.constant 0 : index
    %c0_0 = arith.constant 0 : index
    %0 = vector.load %arg1[%c0, %c0_0] : memref<16x32xf32, #tpu.memory_space<vmem>>, vector<16x32xf32>
    %c0_1 = arith.constant 0 : index
    %c0_2 = arith.constant 0 : index
    %1 = vector.load %arg2[%c0_1, %c0_2] : memref<1x32xf32, #tpu.memory_space<vmem>>, vector<1x32xf32>
    %c0_3 = arith.constant 0 : index
    %c0_4 = arith.constant 0 : index
    %2 = vector.load %arg3[%c0_3, %c0_4] : memref<1x32xf32, #tpu.memory_space<vmem>>, vector<1x32xf32>
    %cst = arith.constant dense<0.000000e+00> : vector<16xf32>
    %3 = vector.multi_reduction <add>, %0, %cst [1] : vector<16x32xf32> to vector<16xf32>
    %4 = vector.shape_cast %3 : vector<16xf32> to vector<16x1xf32>
    %cst_5 = arith.constant 3.200000e+01 : f32
    %5 = vector.broadcast %cst_5 : f32 to vector<16x1xf32>
    %6 = arith.divf %4, %5 : vector<16x1xf32>
    %7 = vector.broadcast %6 : vector<16x1xf32> to vector<16x32xf32>
    %8 = arith.subf %0, %7 : vector<16x32xf32>
    %9 = arith.mulf %8, %8 : vector<16x32xf32>
    %cst_6 = arith.constant dense<0.000000e+00> : vector<16xf32>
    %10 = vector.multi_reduction <add>, %9, %cst_6 [1] : vector<16x32xf32> to vector<16xf32>
    %11 = vector.shape_cast %10 : vector<16xf32> to vector<16x1xf32>
    %cst_7 = arith.constant 3.100000e+01 : f32
    %12 = vector.broadcast %cst_7 : f32 to vector<16x1xf32>
    %13 = arith.divf %11, %12 : vector<16x1xf32>
    %14 = math.sqrt %13 : vector<16x1xf32>
    %15 = vector.broadcast %1 : vector<1x32xf32> to vector<16x32xf32>
    %16 = arith.mulf %15, %8 : vector<16x32xf32>
    %cst_8 = arith.constant 9.99999997E-7 : f32
    %17 = vector.broadcast %cst_8 : f32 to vector<16x1xf32>
    %18 = arith.addf %14, %17 : vector<16x1xf32>
    %19 = vector.broadcast %18 : vector<16x1xf32> to vector<16x32xf32>
    %20 = arith.divf %16, %19 : vector<16x32xf32>
    %21 = vector.broadcast %2 : vector<1x32xf32> to vector<16x32xf32>
    %22 = arith.addf %20, %21 : vector<16x32xf32>
    %c0_9 = arith.constant 0 : index
    %c0_10 = arith.constant 0 : index
    %23 = vector.load %arg4[%c0_9, %c0_10] : memref<32x32xf32, #tpu.memory_space<vmem>>, vector<32x32xf32>
    %cst_11 = arith.constant dense<0.000000e+00> : vector<16x32xf32>
    %24 = tpu.matmul %22, %23, %cst_11 {dimension_numbers = #tpu.dot_dimension_numbers<[1], [0], [0], [1], [0, 0, 1, 1], [], []>} : vector<16x32xf32>, vector<32x32xf32>, vector<16x32xf32> -> vector<16x32xf32>
    %c0_12 = arith.constant 0 : index
    %c0_13 = arith.constant 0 : index
    %25 = vector.load %arg5[%c0_12, %c0_13] : memref<1x32xf32, #tpu.memory_space<vmem>>, vector<1x32xf32>
    %26 = vector.broadcast %25 : vector<1x32xf32> to vector<16x32xf32>
    %27 = arith.addf %24, %26 : vector<16x32xf32>
    %cst_14 = arith.constant 0.000000e+00 : f32
    %28 = vector.broadcast %cst_14 : f32 to vector<16x32xf32>
    %29 = arith.maximumf %27, %28 : vector<16x32xf32>
    %c0_15 = arith.constant 0 : index
    %c0_16 = arith.constant 0 : index
    %30 = vector.load %arg6[%c0_15, %c0_16] : memref<32x32xf32, #tpu.memory_space<vmem>>, vector<32x32xf32>
    %cst_17 = arith.constant dense<0.000000e+00> : vector<16x32xf32>
    %31 = tpu.matmul %29, %30, %cst_17 {dimension_numbers = #tpu.dot_dimension_numbers<[1], [0], [0], [1], [0, 0, 1, 1], [], []>} : vector<16x32xf32>, vector<32x32xf32>, vector<16x32xf32> -> vector<16x32xf32>
    %c0_18 = arith.constant 0 : index
    %c0_19 = arith.constant 0 : index
    %32 = vector.load %arg7[%c0_18, %c0_19] : memref<1x32xf32, #tpu.memory_space<vmem>>, vector<1x32xf32>
    %33 = vector.broadcast %32 : vector<1x32xf32> to vector<16x32xf32>
    %34 = arith.addf %31, %33 : vector<16x32xf32>
    %35 = arith.addf %34, %0 : vector<16x32xf32>
    %c0_20 = arith.constant 0 : index
    %c0_21 = arith.constant 0 : index
    %36 = vector.load %arg8[%c0_20, %c0_21] : memref<16x32xf32, #tpu.memory_space<vmem>>, vector<16x32xf32>
    tpu.vector_store %arg8[%c0_20, %c0_21], %35 {strides = array<i32>} : memref<16x32xf32, #tpu.memory_space<vmem>>, vector<16x32xf32>,
    return
  }
  func.func @transform_0(%arg0: i32) -> (i32, i32) {
    %c0_i32 = arith.constant 0 : i32
    %c0_i32_0 = arith.constant 0 : i32
    return %arg0, %c0_i32 : i32, i32
  }
  func.func @transform_1(%arg0: i32) -> (i32, i32) {
    %c0_i32 = arith.constant 0 : i32
    %c0_i32_0 = arith.constant 0 : i32
    %c0_i32_1 = arith.constant 0 : i32
    return %c0_i32, %c0_i32_0 : i32, i32
  }
  func.func @transform_2(%arg0: i32) -> (i32, i32) {
    %c0_i32 = arith.constant 0 : i32
    %c0_i32_0 = arith.constant 0 : i32
    %c0_i32_1 = arith.constant 0 : i32
    return %c0_i32, %c0_i32_0 : i32, i32
  }
  func.func @transform_3(%arg0: i32) -> (i32, i32) {
    %c0_i32 = arith.constant 0 : i32
    %c0_i32_0 = arith.constant 0 : i32
    %c0_i32_1 = arith.constant 0 : i32
    return %c0_i32, %c0_i32_0 : i32, i32
  }
  func.func @transform_4(%arg0: i32) -> (i32, i32) {
    %c0_i32 = arith.constant 0 : i32
    %c0_i32_0 = arith.constant 0 : i32
    %c0_i32_1 = arith.constant 0 : i32
    return %c0_i32, %c0_i32_0 : i32, i32
  }
  func.func @transform_5(%arg0: i32) -> (i32, i32) {
    %c0_i32 = arith.constant 0 : i32
    %c0_i32_0 = arith.constant 0 : i32
    %c0_i32_1 = arith.constant 0 : i32
    return %c0_i32, %c0_i32_0 : i32, i32
  }
  func.func @transform_6(%arg0: i32) -> (i32, i32) {
    %c0_i32 = arith.constant 0 : i32
    %c0_i32_0 = arith.constant 0 : i32
    %c0_i32_1 = arith.constant 0 : i32
    return %c0_i32, %c0_i32_0 : i32, i32
  }
  func.func @transform_7(%arg0: i32) -> (i32, i32) {
    %c0_i32 = arith.constant 0 : i32
    %c0_i32_0 = arith.constant 0 : i32
    return %arg0, %c0_i32 : i32, i32
  }
}

module attributes {stable_mosaic.version = 11 : i64} {
  func.func @_ffn_kernel(%arg0: i32, %arg1: memref<16x32xf32, #tpu.memory_space<vmem>>, %arg2: memref<1x32xf32, #tpu.memory_space<vmem>>, %arg3: memref<1x32xf32, #tpu.memory_space<vmem>>, %arg4: memref<32x32xf32, #tpu.memory_space<vmem>>, %arg5: memref<1x32xf32, #tpu.memory_space<vmem>>, %arg6: memref<32x32xf32, #tpu.memory_space<vmem>>, %arg7: memref<1x32xf32, #tpu.memory_space<vmem>>, %arg8: memref<16x32xf32, #tpu.memory_space<vmem>>) attributes {dimension_semantics = [#tpu.dimension_semantics<parallel>], iteration_bounds = array<i64: 1>, scalar_prefetch = 0 : i64, scratch_operands = 0 : i64, tpu.core_type = #tpu.core_type<tc>, window_params = [{transform_indices = @transform_0, window_bounds = array<i64: 16, 32>}, {pipeline_mode = #tpu.pipeline_mode<synchronous>, transform_indices = @transform_1, window_bounds = array<i64: 1, 32>}, {pipeline_mode = #tpu.pipeline_mode<synchronous>, transform_indices = @transform_2, window_bounds = array<i64: 1, 32>}, {pipeline_mode = #tpu.pipeline_mode<synchronous>, transform_indices = @transform_3, window_bounds = array<i64: 32, 32>}, {pipeline_mode = #tpu.pipeline_mode<synchronous>, transform_indices = @transform_4, window_bounds = array<i64: 1, 32>}, {pipeline_mode = #tpu.pipeline_mode<synchronous>, transform_indices = @transform_5, window_bounds = array<i64: 32, 32>}, {pipeline_mode = #tpu.pipeline_mode<synchronous>, transform_indices = @transform_6, window_bounds = array<i64: 1, 32>}, {transform_indices = @transform_7, window_bounds = array<i64: 16, 32>}]} {
    %c0 = arith.constant 0 : index
    %c0_0 = arith.constant 0 : index
    %0 = vector.load %arg1[%c0, %c0_0] : memref<16x32xf32, #tpu.memory_space<vmem>>, vector<16x32xf32>
    %c0_1 = arith.constant 0 : index
    %c0_2 = arith.constant 0 : index
    %1 = vector.load %arg2[%c0_1, %c0_2] : memref<1x32xf32, #tpu.memory_space<vmem>>, vector<1x32xf32>
    %c0_3 = arith.constant 0 : index
    %c0_4 = arith.constant 0 : index
    %2 = vector.load %arg3[%c0_3, %c0_4] : memref<1x32xf32, #tpu.memory_space<vmem>>, vector<1x32xf32>
    %cst = arith.constant dense<0.000000e+00> : vector<16xf32>
    %3 = vector.multi_reduction <add>, %0, %cst [1] : vector<16x32xf32> to vector<16xf32>
    %4 = vector.shape_cast %3 : vector<16xf32> to vector<16x1xf32>
    %cst_5 = arith.constant 3.200000e+01 : f32
    %5 = vector.broadcast %cst_5 : f32 to vector<16x1xf32>
    %6 = arith.divf %4, %5 : vector<16x1xf32>
    %7 = vector.broadcast %6 : vector<16x1xf32> to vector<16x32xf32>
    %8 = arith.subf %0, %7 : vector<16x32xf32>
    %9 = arith.mulf %8, %8 : vector<16x32xf32>
    %cst_6 = arith.constant dense<0.000000e+00> : vector<16xf32>
    %10 = vector.multi_reduction <add>, %9, %cst_6 [1] : vector<16x32xf32> to vector<16xf32>
    %11 = vector.shape_cast %10 : vector<16xf32> to vector<16x1xf32>
    %cst_7 = arith.constant 3.100000e+01 : f32
    %12 = vector.broadcast %cst_7 : f32 to vector<16x1xf32>
    %13 = arith.divf %11, %12 : vector<16x1xf32>
    %14 = math.sqrt %13 : vector<16x1xf32>
    %15 = vector.broadcast %1 : vector<1x32xf32> to vector<16x32xf32>
    %16 = arith.mulf %15, %8 : vector<16x32xf32>
    %cst_8 = arith.constant 9.99999997E-7 : f32
    %17 = vector.broadcast %cst_8 : f32 to vector<16x1xf32>
    %18 = arith.addf %14, %17 : vector<16x1xf32>
    %19 = vector.broadcast %18 : vector<16x1xf32> to vector<16x32xf32>
    %20 = arith.divf %16, %19 : vector<16x32xf32>
    %21 = vector.broadcast %2 : vector<1x32xf32> to vector<16x32xf32>
    %22 = arith.addf %20, %21 : vector<16x32xf32>
    %c0_9 = arith.constant 0 : index
    %c0_10 = arith.constant 0 : index
    %23 = vector.load %arg4[%c0_9, %c0_10] : memref<32x32xf32, #tpu.memory_space<vmem>>, vector<32x32xf32>
    %cst_11 = arith.constant dense<0.000000e+00> : vector<16x32xf32>
    %24 = tpu.matmul %22, %23, %cst_11 {dimension_numbers = #tpu.dot_dimension_numbers<[1], [0], [0], [1], [0, 0, 1, 1], [], []>} : vector<16x32xf32>, vector<32x32xf32>, vector<16x32xf32> -> vector<16x32xf32>
    %c0_12 = arith.constant 0 : index
    %c0_13 = arith.constant 0 : index
    %25 = vector.load %arg5[%c0_12, %c0_13] : memref<1x32xf32, #tpu.memory_space<vmem>>, vector<1x32xf32>
    %26 = vector.broadcast %25 : vector<1x32xf32> to vector<16x32xf32>
    %27 = arith.addf %24, %26 : vector<16x32xf32>
    %cst_14 = arith.constant 0.000000e+00 : f32
    %28 = vector.broadcast %cst_14 : f32 to vector<16x32xf32>
    %29 = arith.maximumf %27, %28 : vector<16x32xf32>
    %c0_15 = arith.constant 0 : index
    %c0_16 = arith.constant 0 : index
    %30 = vector.load %arg6[%c0_15, %c0_16] : memref<32x32xf32, #tpu.memory_space<vmem>>, vector<32x32xf32>
    %cst_17 = arith.constant dense<0.000000e+00> : vector<16x32xf32>
    %31 = tpu.matmul %29, %30, %cst_17 {dimension_numbers = #tpu.dot_dimension_numbers<[1], [0], [0], [1], [0, 0, 1, 1], [], []>} : vector<16x32xf32>, vector<32x32xf32>, vector<16x32xf32> -> vector<16x32xf32>
    %c0_18 = arith.constant 0 : index
    %c0_19 = arith.constant 0 : index
    %32 = vector.load %arg7[%c0_18, %c0_19] : memref<1x32xf32, #tpu.memory_space<vmem>>, vector<1x32xf32>
    %33 = vector.broadcast %32 : vector<1x32xf32> to vector<16x32xf32>
    %34 = arith.addf %31, %33 : vector<16x32xf32>
    %35 = arith.addf %34, %0 : vector<16x32xf32>
    %c0_20 = arith.constant 0 : index
    %c0_21 = arith.constant 0 : index
    %36 = vector.load %arg8[%c0_20, %c0_21] : memref<16x32xf32, #tpu.memory_space<vmem>>, vector<16x32xf32>
    tpu.vector_store %arg8[%c0_20, %c0_21], %35 {strides = array<i32>} : memref<16x32xf32, #tpu.memory_space<vmem>>, vector<16x32xf32>,
    return
  }
  func.func @transform_0(%arg0: i32) -> (i32, i32) {
    %c0_i32 = arith.constant 0 : i32
    %c0_i32_0 = arith.constant 0 : i32
    return %arg0, %c0_i32 : i32, i32
  }
  func.func @transform_1(%arg0: i32) -> (i32, i32) {
    %c0_i32 = arith.constant 0 : i32
    %c0_i32_0 = arith.constant 0 : i32
    %c0_i32_1 = arith.constant 0 : i32
    return %c0_i32, %c0_i32_0 : i32, i32
  }
  func.func @transform_2(%arg0: i32) -> (i32, i32) {
    %c0_i32 = arith.constant 0 : i32
    %c0_i32_0 = arith.constant 0 : i32
    %c0_i32_1 = arith.constant 0 : i32
    return %c0_i32, %c0_i32_0 : i32, i32
  }
  func.func @transform_3(%arg0: i32) -> (i32, i32) {
    %c0_i32 = arith.constant 0 : i32
    %c0_i32_0 = arith.constant 0 : i32
    %c0_i32_1 = arith.constant 0 : i32
    return %c0_i32, %c0_i32_0 : i32, i32
  }
  func.func @transform_4(%arg0: i32) -> (i32, i32) {
    %c0_i32 = arith.constant 0 : i32
    %c0_i32_0 = arith.constant 0 : i32
    %c0_i32_1 = arith.constant 0 : i32
    return %c0_i32, %c0_i32_0 : i32, i32
  }
  func.func @transform_5(%arg0: i32) -> (i32, i32) {
    %c0_i32 = arith.constant 0 : i32
    %c0_i32_0 = arith.constant 0 : i32
    %c0_i32_1 = arith.constant 0 : i32
    return %c0_i32, %c0_i32_0 : i32, i32
  }
  func.func @transform_6(%arg0: i32) -> (i32, i32) {
    %c0_i32 = arith.constant 0 : i32
    %c0_i32_0 = arith.constant 0 : i32
    %c0_i32_1 = arith.constant 0 : i32
    return %c0_i32, %c0_i32_0 : i32, i32
  }
  func.func @transform_7(%arg0: i32) -> (i32, i32) {
    %c0_i32 = arith.constant 0 : i32
    %c0_i32_0 = arith.constant 0 : i32
    return %arg0, %c0_i32 : i32, i32
  }
}

</mosaic_0001>

<llo_original>
// kernel: _lambda_.16
$region0: #{_lambda_.16}
  #allocation0 [shape = 'u32[]', space=smem, size = 0x4, offset = 0x4, fixed_abs, tag = 'smem constant byte address 0x4 - core index']
  #allocation1 [shape = 'u32[144,128]{1,0:T(1,128)}', space=vmem, size = 0x12000, scoped, tag = 'internal scratch']
  %s0 = inlined_call_operand.vmem [shape: f32[16,32], index: 0, kind: input, shape index: {}]
  %s1 = inlined_call_operand.vmem [shape: f32[1,32], index: 1, kind: input, shape index: {}]
  %s2 = inlined_call_operand.vmem [shape: f32[1,32], index: 2, kind: input, shape index: {}]
  %s3 = inlined_call_operand.vmem [shape: f32[32,192], index: 3, kind: input, shape index: {}]
  %s4 = inlined_call_operand.vmem [shape: f32[1,192], index: 4, kind: input, shape index: {}]
  %s5 = inlined_call_operand.vmem [shape: f32[16,64], index: 5, kind: output, shape index: {0}]
  %s6 = inlined_call_operand.vmem [shape: f32[16,64], index: 6, kind: output, shape index: {1}]
  %s7 = inlined_call_operand.vmem [shape: f32[16,64], index: 7, kind: output, shape index: {2}]
  %8 = xla_tuple %s5, %s6, %s7
  %s9 = sld [smem:[#allocation0]]
  $region46: #{_lambda_.16} parent=0
    _
  %s11 = ssub.s32 1, %s9
  %s12 = scalar_select 0, %s11, %s9
  // Predicated region
  $region2: #{_lambda_.16} parent=0 // pred_check
    _
  $region3: #{_lambda_.16} parent=0 // pred_check_branch
    %14 = sbr.rel (0) target = $region5
  $region4: #{_lambda_.16} parent=0 // pred_region
    _
  $region5: #{_lambda_.16} parent=0 // pred_fallthru
    _
  // Predicated region
  $region6: #{_lambda_.16} parent=0 // pred_check
    _
  $region7: #{_lambda_.16} parent=0 // pred_check_branch
    %16 = sbr.rel (0) target = $region9
  $region8: #{_lambda_.16} parent=0 // pred_region
    _
  $region9: #{_lambda_.16} parent=0 // pred_fallthru
    _
  // Predicated region
  $region10: #{_lambda_.16} parent=0 // pred_check
    _
  $region11: #{_lambda_.16} parent=0 // pred_check_branch
    %18 = sbr.rel (0) target = $region13
  $region12: #{_lambda_.16} parent=0 // pred_region
    _
  $region13: #{_lambda_.16} parent=0 // pred_fallthru
    _
  // Predicated region
  $region14: #{_lambda_.16} parent=0 // pred_check
    _
  $region15: #{_lambda_.16} parent=0 // pred_check_branch
    %20 = sbr.rel (0) target = $region17
  $region16: #{_lambda_.16} parent=0 // pred_region
    _
  $region17: #{_lambda_.16} parent=0 // pred_fallthru
    _
  // Predicated region
  $region18: #{_lambda_.16} parent=0 // pred_check
    _
  $region19: #{_lambda_.16} parent=0 // pred_check_branch
    %22 = sbr.rel (0) target = $region21
  $region20: #{_lambda_.16} parent=0 // pred_region
    _
  $region21: #{_lambda_.16} parent=0 // pred_fallthru
    _
  %v23 = vld [vmem:[%s0] sm:$0xff]
  %v24 = vld [vmem:[%s0 + $0x8] sm:$0xff]
  %v25 = vld [vmem:[%s1] sm:$0x1]
  %v26 = vld [vmem:[%s2] sm:$0x1]
  %vm27 = vcmask 261120
  %v28 = vsel %vm27, %v23, 0.0
  %29 = vadd.xlane.f32.xlu0 %v28
  %v30 = vpop.xlane.xlu0 %29
  %v31 = vsel %vm27, %v24, 0.0
  %32 = vadd.xlane.f32.xlu0 %v31
  %v33 = vpop.xlane.xlu0 %32
  %v34 = vrcp.pop 32.0
  %v35 = vmul.f32 %v30, %v34
  %v36 = vmul.f32 %v33, %v34
  %v37 = vsub.f32 %v23, %v35
  %v38 = vsub.f32 %v24, %v36
  %v39 = vmul.f32 %v37, %v37
  %v40 = vmul.f32 %v38, %v38
  %v41 = vsel %vm27, %v39, 0.0
  %42 = vadd.xlane.f32.xlu0 %v41
  %v43 = vpop.xlane.xlu0 %42
  %v44 = vsel %vm27, %v40, 0.0
  %45 = vadd.xlane.f32.xlu0 %v44
  %v46 = vpop.xlane.xlu0 %45
  %v47 = vrcp.pop 31.0
  %v48 = vmul.f32 %v43, %v47
  %v49 = vmul.f32 %v46, %v47
  %v50 = vrsqrt.pop %v48
  %v51 = vmul.f32 %v48, %v50
  %vm52 = vcmp.eq.f32.partialorder %v48, inf
  %v53 = vsel %vm52, %v48, %v51
  %vm54 = vcmp.eq.f32.partialorder %v48, 0.0
  %v55 = vand.u32 %v48, 2147483648
  %v56 = vsel %vm54, %v55, %v53
  %v57 = vrsqrt.pop %v49
  %v58 = vmul.f32 %v49, %v57
  %vm59 = vcmp.eq.f32.partialorder %v49, inf
  %v60 = vsel %vm59, %v49, %v58
  %vm61 = vcmp.eq.f32.partialorder %v49, 0.0
  %v62 = vand.u32 %v49, 2147483648
  %v63 = vsel %vm61, %v62, %v60
  %v65 = vlaneseq
  %v66 = vshrl.u32 %v65, 7
  %v67 = vsub.s32 0, %v66
  %v68 = vrot.slane %v25, %v67
  %v70 = vmul.f32 %v68, %v37
  %v71 = vmul.f32 %v68, %v38
  %v72 = vadd.f32 %v56, 1e-06
  %v73 = vadd.f32 %v63, 1e-06
  %v74 = vrcp.pop %v72
  %v75 = vmul.f32 %v70, %v74
  %v76 = vrcp.pop %v73
  %v77 = vmul.f32 %v71, %v76
  %v79 = vlaneseq
  %v80 = vshrl.u32 %v79, 7
  %v81 = vsub.s32 0, %v80
  %v82 = vrot.slane %v26, %v81
  %v84 = vadd.f32 %v75, %v82
  %v85 = vadd.f32 %v77, %v82
  %v86 = vld [vmem:[%s3] sm:$0xff]
  %v87 = vld [vmem:[%s3 + $0x8] sm:$0xff]
  %v88 = vld [vmem:[%s3 + $0x10] sm:$0xff]
  %v89 = vld [vmem:[%s3 + $0x18] sm:$0xff]
  %v90 = vld [vmem:[%s3 + $0x20] sm:$0xff]
  %v91 = vld [vmem:[%s3 + $0x28] sm:$0xff]
  %v92 = vld [vmem:[%s3 + $0x30] sm:$0xff]
  %v93 = vld [vmem:[%s3 + $0x38] sm:$0xff]
  %v94 = vld [vmem:[%s4] sm:$0x3]
  %v96 = vlaneseq
  %v97 = vshrl.u32 %v96, 7
  %v98 = vsub.s32 0, %v97
  %v99 = vrot.slane %v94, %v98
  %v100 = vlaneseq
  %v101 = vshrl.u32 %v100, 7
  %v102 = vsub.s32 1, %v101
  %v103 = vrot.slane %v94, %v102
  %v107 = vsel %vm27, %v84, 0
  %v110 = vsel %vm27, %v85, 0
  %112 = vmatprep.subr.mxu0 %v87
  %113 = vmatpush1.msra.mxu0 %v86
  %114 = vmatprep.subr.mxu0 %v89
  %115 = vmatpush1.msra.mxu0 %v88
  %116 = vmatprep.subr.mxu0 %v91
  %117 = vmatpush1.msra.mxu0 %v90
  %118 = vmatprep.subr.mxu0 %v93
  %119 = vmatpush1.msra.mxu0 %v92
  %120 = vmatprep.subr.mxu0 0.0
  %121 = vmatpush1.msra.mxu0 0.0
  %122 = vmatprep.subr.mxu0 0.0
  %123 = vmatpush1.msra.mxu0 0.0
  %124 = vmatprep.subr.mxu0 0.0
  %125 = vmatpush1.msra.mxu0 0.0
  %126 = vmatprep.subr.mxu0 0.0
  %127 = vmatpush1.msra.mxu0 0.0
  %128 = vmatprep.subr.mxu0 0.0
  %129 = vmatpush1.msra.mxu0 0.0
  %130 = vmatprep.subr.mxu0 0.0
  %131 = vmatpush1.msra.mxu0 0.0
  %132 = vmatprep.subr.mxu0 0.0
  %133 = vmatpush1.msra.mxu0 0.0
  %134 = vmatprep.subr.mxu0 0.0
  %135 = vmatpush1.msra.mxu0 0.0
  %136 = vmatprep.subr.mxu0 0.0
  %137 = vmatpush1.msra.mxu0 0.0
  %138 = vmatprep.subr.mxu0 0.0
  %139 = vmatpush1.msra.mxu0 0.0
  %140 = vmatprep.subr.mxu0 0.0
  %141 = vmatpush1.msra.mxu0 0.0
  %142 = vmatprep.subr.mxu0 0.0
  %143 = vmatpush1.msra.mxu0 0.0
  %144 = vmatprep.subr.mxu0 0.0
  %145 = vmatpush1.msra.mxu0 0.0
  %146 = vmatprep.subr.mxu0 0.0
  %147 = vmatpush1.msra.mxu0 0.0
  %148 = vmatprep.subr.mxu0 0.0
  %149 = vmatpush1.msra.mxu0 0.0
  %150 = vmatprep.subr.mxu0 0.0
  %151 = vmatpush1.msra.mxu0 0.0
  %152 = vmatprep.subr.mxu0 0.0
  %153 = vmatpush1.msra.mxu0 0.0
  %154 = vmatprep.subr.mxu0 0.0
  %155 = vmatpush1.msra.mxu0 0.0
  %156 = vmatprep.subr.mxu0 0.0
  %157 = vmatpush1.msra.mxu0 0.0
  %158 = vmatprep.subr.mxu0 0.0
  %159 = vmatpush1.msra.mxu0 0.0
  %160 = vmatprep.subr.mxu0 0.0
  %161 = vmatpush1.msra.mxu0 0.0
  %162 = vmatprep.subr.mxu0 0.0
  %163 = vmatpush1.msra.mxu0 0.0
  %164 = vmatprep.subr.mxu0 0.0
  %165 = vmatpush1.msra.mxu0 0.0
  %166 = vmatprep.subr.mxu0 0.0
  %167 = vmatpush1.msra.mxu0 0.0
  %168 = vmatprep.subr.mxu0 0.0
  %169 = vmatpush1.msra.mxu0 0.0
  %170 = vmatprep.subr.mxu0 0.0
  %171 = vmatpush1.msra.mxu0 0.0
  %172 = vmatprep.subr.mxu0 0.0
  %173 = vmatpush1.msra.mxu0 0.0
  %174 = vmatprep.subr.mxu0 0.0
  %175 = vmatpush1.msra.mxu0 0.0
  %176 = vmatprep.mubr.f32.mxu0 0.0
  %177 = vmatmul.mubr.f32.gmra.mrb[0].mxu0 %v107
  %v178 = vpop.f32.mrb[0].mxu0
  %v179 = vadd.f32 %v99, %v178
  %v180 = vpop.f32.mrb[0].mxu0
  %v181 = vadd.f32 %v103, %v180
  %182 = vmatprep.mubr.f32.mxu0 0.0
  %183 = vmatmul.mubr.f32.gmra.mrb[0].mxu0 %v110
  %v184 = vpop.f32.mrb[0].mxu0
  %v185 = vadd.f32 %v99, %v184
  %v186 = vpop.f32.mrb[0].mxu0
  %v187 = vadd.f32 %v103, %v186
  %188 = vdwg.mxu0
  %vm189 = vcmask 523264
  %190 = vst.msk [vmem:[%s5] sm:$0xff] %vm189, %v179
  %191 = vst.msk [vmem:[%s5 + $0x8] sm:$0xff] %vm189, %v185
  %194 = vrot.lane.b32.xlu0 %v179, 64
  %v195 = vpop.permute.xlu0 %194
  %196 = vrot.lane.b32.xlu0 %v185, 64
  %v197 = vpop.permute.xlu0 %196
  %200 = vst.msk [vmem:[%s6] sm:$0xff] %vm189, %v195
  %201 = vst.msk [vmem:[%s6 + $0x8] sm:$0xff] %vm189, %v197
  %202 = vst.msk [vmem:[%s7] sm:$0xff] %vm189, %v181
  %203 = vst.msk [vmem:[%s7 + $0x8] sm:$0xff] %vm189, %v187
  // Predicated region
  $region22: #{_lambda_.16} parent=0 // pred_check
    _
  $region23: #{_lambda_.16} parent=0 // pred_check_branch
    %205 = sbr.rel (0) target = $region25
  $region24: #{_lambda_.16} parent=0 // pred_region
    _
  $region25: #{_lambda_.16} parent=0 // pred_fallthru
    _
  // Predicated region
  $region26: #{_lambda_.16} parent=0 // pred_check
    _
  $region27: #{_lambda_.16} parent=0 // pred_check_branch
    %207 = sbr.rel (0) target = $region29
  $region28: #{_lambda_.16} parent=0 // pred_region
    _
  $region29: #{_lambda_.16} parent=0 // pred_fallthru
    _
  // Predicated region
  $region30: #{_lambda_.16} parent=0 // pred_check
    _
  $region31: #{_lambda_.16} parent=0 // pred_check_branch
    %209 = sbr.rel (0) target = $region33
  $region32: #{_lambda_.16} parent=0 // pred_region
    _
  $region33: #{_lambda_.16} parent=0 // pred_fallthru
    _
  // Predicated region
  $region34: #{_lambda_.16} parent=0 // pred_check
    _
  $region35: #{_lambda_.16} parent=0 // pred_check_branch
    %211 = sbr.rel (0) target = $region37
  $region36: #{_lambda_.16} parent=0 // pred_region
    _
  $region37: #{_lambda_.16} parent=0 // pred_fallthru
    _
  // Predicated region
  $region38: #{_lambda_.16} parent=0 // pred_check
    _
  $region39: #{_lambda_.16} parent=0 // pred_check_branch
    %213 = sbr.rel (0) target = $region41
  $region40: #{_lambda_.16} parent=0 // pred_region
    _
  $region41: #{_lambda_.16} parent=0 // pred_fallthru
    _
  // Predicated region
  $region42: #{_lambda_.16} parent=0 // pred_check
    _
  $region43: #{_lambda_.16} parent=0 // pred_check_branch
    %215 = sbr.rel (0) target = $region45
  $region44: #{_lambda_.16} parent=0 // pred_region
    _
  $region45: #{_lambda_.16} parent=0 // pred_fallthru
    _

// kernel: _lambda_.17
$region0: #{_lambda_.17}
  #allocation0 [shape = 'u32[]', space=smem, size = 0x4, offset = 0x4, fixed_abs, tag = 'smem constant byte address 0x4 - core index']
  #allocation1 [shape = 'u32[144,128]{1,0:T(1,128)}', space=vmem, size = 0x12000, scoped, tag = 'internal scratch']
  %s0 = inlined_call_operand.vmem [shape: f32[2,8,64], index: 0, kind: input, shape index: {}]
  %s1 = inlined_call_operand.vmem [shape: f32[2,8,64], index: 1, kind: input, shape index: {}]
  %s2 = inlined_call_operand.vmem [shape: f32[2,8,64], index: 2, kind: input, shape index: {}]
  %s3 = inlined_call_operand.vmem [shape: s32[2,8,8], index: 3, kind: input, shape index: {}]
  %s4 = inlined_call_operand.vmem [shape: f32[2,8,64], index: 4, kind: output, shape index: {}]
  %s5 = sld [smem:[#allocation0]]
  $region49: #{_lambda_.17} parent=0
    _
  %s7 = ssub.s32 1, %s5
  %s8 = scalar_select 0, %s7, %s5
  loop: start=0, step=1, limit=4
  $region2: #{_lambda_.17} parent=0 // loop_pre_header
    _
  $region3: #{_lambda_.17} parent=0 // loop_header
    %s10 = sphi 0, %s14
    %p11 = scmp.ge.s32.totalorder %s10, 4
    %s20 = sphi 0, %s22
    %s23 = sphi 0, %s20
    %s24 = sphi 0, %s23
    %s40 = sphi 0, %s24
    %s46 = sphi 0, %s48
    %s49 = sphi 0, %s46
    %s50 = sphi 0, %s49
    %s66 = sphi 0, %s50
    %s72 = sphi 0, %s74
    %s75 = sphi 0, %s72
    %s76 = sphi 0, %s75
    %s92 = sphi 0, %s76
    %s98 = sphi 0, %s100
    %s101 = sphi 0, %s98
    %s102 = sphi 0, %s101
    %s118 = sphi 0, %s102
    %s124 = sphi 0, %s126
    %s127 = sphi 0, %s124
    %s128 = sphi 0, %s127
    %s144 = sphi 0, %s128
  $region4: #{_lambda_.17} parent=0 // loop_header_branch
    %13 = sbr.rel (%p11) target = $region8
  $region5: #{_lambda_.17} parent=0 // loop_body
    %s15 = ssub.s32 %s10, 1
    %s16 = ssub.s32 %s10, 2
    %s17 = sadd.s32 %s10, 1
    %s18 = ssub.s32 %s10, %s17
    %p19 = scmp.eq.s32.totalorder %s18, 0
    %s21 = sadd.s32 %s20, 1
    %s22 = scalar_select %p19, %s20, %s21
    %p25 = pneg %p19
    %p26 = scmp.eq.s32.totalorder %s10, 1
    %p27 = por %p25, %p26
    %p28 = scmp.ne.s32.totalorder %s20, %s23
    %p29 = scmp.eq.s32.totalorder %s10, 0
    %p30 = por %p28, %p29
    %p31 = scmp.ne.s32.totalorder %s20, %s23
    %p32 = scmp.eq.s32.totalorder %s15, 1
    %p33 = por %p31, %p32
    %p34 = scmp.ne.s32.totalorder %s23, %s24
    %p35 = scmp.eq.s32.totalorder %s15, 0
    %p36 = por %p34, %p35
    %p37 = scmp.ne.s32.totalorder %s23, %s24
    %p38 = scmp.eq.s32.totalorder %s16, 1
    %p39 = por %p37, %p38
    %p41 = scmp.ne.s32.totalorder %s24, %s40
    %p42 = scmp.eq.s32.totalorder %s16, 0
    %p43 = por %p41, %p42
    %s44 = ssub.s32 %s10, %s17
    %p45 = scmp.eq.s32.totalorder %s44, 0
    %s47 = sadd.s32 %s46, 1
    %s48 = scalar_select %p45, %s46, %s47
    %p51 = pneg %p45
    %p52 = scmp.eq.s32.totalorder %s10, 1
    %p53 = por %p51, %p52
    %p54 = scmp.ne.s32.totalorder %s46, %s49
    %p55 = scmp.eq.s32.totalorder %s10, 0
    %p56 = por %p54, %p55
    %p57 = scmp.ne.s32.totalorder %s46, %s49
    %p58 = scmp.eq.s32.totalorder %s15, 1
    %p59 = por %p57, %p58
    %p60 = scmp.ne.s32.totalorder %s49, %s50
    %p61 = scmp.eq.s32.totalorder %s15, 0
    %p62 = por %p60, %p61
    %p63 = scmp.ne.s32.totalorder %s49, %s50
    %p64 = scmp.eq.s32.totalorder %s16, 1
    %p65 = por %p63, %p64
    %p67 = scmp.ne.s32.totalorder %s50, %s66
    %p68 = scmp.eq.s32.totalorder %s16, 0
    %p69 = por %p67, %p68
    %s70 = ssub.s32 %s10, %s17
    %p71 = scmp.eq.s32.totalorder %s70, 0
    %s73 = sadd.s32 %s72, 1
    %s74 = scalar_select %p71, %s72, %s73
    %p77 = pneg %p71
    %p78 = scmp.eq.s32.totalorder %s10, 1
    %p79 = por %p77, %p78
    %p80 = scmp.ne.s32.totalorder %s72, %s75
    %p81 = scmp.eq.s32.totalorder %s10, 0
    %p82 = por %p80, %p81
    %p83 = scmp.ne.s32.totalorder %s72, %s75
    %p84 = scmp.eq.s32.totalorder %s15, 1
    %p85 = por %p83, %p84
    %p86 = scmp.ne.s32.totalorder %s75, %s76
    %p87 = scmp.eq.s32.totalorder %s15, 0
    %p88 = por %p86, %p87
    %p89 = scmp.ne.s32.totalorder %s75, %s76
    %p90 = scmp.eq.s32.totalorder %s16, 1
    %p91 = por %p89, %p90
    %p93 = scmp.ne.s32.totalorder %s76, %s92
    %p94 = scmp.eq.s32.totalorder %s16, 0
    %p95 = por %p93, %p94
    %s96 = ssub.s32 %s10, %s17
    %p97 = scmp.eq.s32.totalorder %s96, 0
    %s99 = sadd.s32 %s98, 1
    %s100 = scalar_select %p97, %s98, %s99
    %p103 = pneg %p97
    %p104 = scmp.eq.s32.totalorder %s10, 1
    %p105 = por %p103, %p104
    %p106 = scmp.ne.s32.totalorder %s98, %s101
    %p107 = scmp.eq.s32.totalorder %s10, 0
    %p108 = por %p106, %p107
    %p109 = scmp.ne.s32.totalorder %s98, %s101
    %p110 = scmp.eq.s32.totalorder %s15, 1
    %p111 = por %p109, %p110
    %p112 = scmp.ne.s32.totalorder %s101, %s102
    %p113 = scmp.eq.s32.totalorder %s15, 0
    %p114 = por %p112, %p113
    %p115 = scmp.ne.s32.totalorder %s101, %s102
    %p116 = scmp.eq.s32.totalorder %s16, 1
    %p117 = por %p115, %p116
    %p119 = scmp.ne.s32.totalorder %s102, %s118
    %p120 = scmp.eq.s32.totalorder %s16, 0
    %p121 = por %p119, %p120
    %s122 = ssub.s32 %s10, %s17
    %p123 = scmp.eq.s32.totalorder %s122, 0
    %s125 = sadd.s32 %s124, 1
    %s126 = scalar_select %p123, %s124, %s125
    %p129 = pneg %p123
    %p130 = scmp.eq.s32.totalorder %s10, 1
    %p131 = por %p129, %p130
    %p132 = scmp.ne.s32.totalorder %s124, %s127
    %p133 = scmp.eq.s32.totalorder %s10, 0
    %p134 = por %p132, %p133
    %p135 = scmp.ne.s32.totalorder %s124, %s127
    %p136 = scmp.eq.s32.totalorder %s15, 1
    %p137 = por %p135, %p136
    %p138 = scmp.ne.s32.totalorder %s127, %s128
    %p139 = scmp.eq.s32.totalorder %s15, 0
    %p140 = por %p138, %p139
    %p141 = scmp.ne.s32.totalorder %s127, %s128
    %p142 = scmp.eq.s32.totalorder %s16, 1
    %p143 = por %p141, %p142
    %p145 = scmp.ne.s32.totalorder %s128, %s144
    %p146 = scmp.eq.s32.totalorder %s16, 0
    %p147 = por %p145, %p146
    %p148 = scmp.le.s32.totalorder 1, %s10
    %p149 = scmp.lt.s32.totalorder %s10, 3
    %p150 = pnand %p148, %p149
    %p151 = pneg %p150
    // Predicated region
    $region9: #{_lambda_.17} parent=5 // pred_check
      _
    $region10: #{_lambda_.17} parent=5 // pred_check_branch
      %153 = sbr.rel (%p150) target = $region12
    $region11: #{_lambda_.17} parent=5 // pred_region
      %s154 = ssub.s32 %s10, 1
    $region12: #{_lambda_.17} parent=5 // pred_fallthru
      _
    %p155 = scmp.lt.s32.totalorder %s10, 2
    // Predicated region
    $region13: #{_lambda_.17} parent=5 // pred_check
      %p156 = pneg %p155
    $region14: #{_lambda_.17} parent=5 // pred_check_branch
      %158 = sbr.rel (%p156) target = $region16
    $region15: #{_lambda_.17} parent=5 // pred_region
      // Predicated region
      $region17: #{_lambda_.17} parent=15 // pred_check
        %p159 = pneg %p30
      $region18: #{_lambda_.17} parent=15 // pred_check_branch
        %161 = sbr.rel (%p159) target = $region20
      $region19: #{_lambda_.17} parent=15 // pred_region
        %p162 = scmp.lt.s32.totalorder %s10, 1
        %s163 = scalar_select %p162, %s10, 1
        %s164 = smul.addr %s163, 8
        %s165 = scalar_lea.vmem %s0, %s164
      $region20: #{_lambda_.17} parent=15 // pred_fallthru
        _
      // Predicated region
      $region21: #{_lambda_.17} parent=15 // pred_check
        %p166 = pneg %p56
      $region22: #{_lambda_.17} parent=15 // pred_check_branch
        %168 = sbr.rel (%p166) target = $region24
      $region23: #{_lambda_.17} parent=15 // pred_region
        %p169 = scmp.lt.s32.totalorder %s10, 1
        %s170 = scalar_select %p169, %s10, 1
        %s171 = smul.addr %s170, 8
        %s172 = scalar_lea.vmem %s1, %s171
      $region24: #{_lambda_.17} parent=15 // pred_fallthru
        _
      // Predicated region
      $region25: #{_lambda_.17} parent=15 // pred_check
        %p173 = pneg %p82
      $region26: #{_lambda_.17} parent=15 // pred_check_branch
        %175 = sbr.rel (%p173) target = $region28
      $region27: #{_lambda_.17} parent=15 // pred_region
        %p176 = scmp.lt.s32.totalorder %s10, 1
        %s177 = scalar_select %p176, %s10, 1
        %s178 = smul.addr %s177, 8
        %s179 = scalar_lea.vmem %s2, %s178
      $region28: #{_lambda_.17} parent=15 // pred_fallthru
        _
      // Predicated region
      $region29: #{_lambda_.17} parent=15 // pred_check
        %p180 = pneg %p108
      $region30: #{_lambda_.17} parent=15 // pred_check_branch
        %182 = sbr.rel (%p180) target = $region32
      $region31: #{_lambda_.17} parent=15 // pred_region
        %p183 = scmp.lt.s32.totalorder %s10, 1
        %s184 = scalar_select %p183, %s10, 1
        %s185 = smul.addr %s184, 8
        %s186 = scalar_lea.vmem %s3, %s185
      $region32: #{_lambda_.17} parent=15 // pred_fallthru
        _
    $region16: #{_lambda_.17} parent=5 // pred_fallthru
      _
    %p187 = scmp.le.s32.totalorder 1, %s10
    %p188 = scmp.lt.s32.totalorder %s10, 3
    %p189 = pnand %p187, %p188
    %p190 = pneg %p189
    // Predicated region
    $region33: #{_lambda_.17} parent=5 // pred_check
      _
    $region34: #{_lambda_.17} parent=5 // pred_check_branch
      %192 = sbr.rel (%p189) target = $region36
    $region35: #{_lambda_.17} parent=5 // pred_region
      %s193 = ssub.s32 %s10, 1
      %p194 = scmp.lt.s32.totalorder %s15, 1
      %s195 = scalar_select %p194, %s15, 1
      %s196 = smul.addr %s195, 8
      %s197 = scalar_lea.vmem %s0, %s196
      %p198 = pneg %p36
      %p199 = pneg %p33
      %p200 = scmp.lt.s32.totalorder %s15, 1
      %s201 = scalar_select %p200, %s15, 1
      %s202 = smul.addr %s201, 8
      %s203 = scalar_lea.vmem %s1, %s202
      %p204 = pneg %p62
      %p205 = pneg %p59
      %p206 = scmp.lt.s32.totalorder %s15, 1
      %s207 = scalar_select %p206, %s15, 1
      %s208 = smul.addr %s207, 8
      %s209 = scalar_lea.vmem %s2, %s208
      %p210 = pneg %p88
      %p211 = pneg %p85
      %p212 = scmp.lt.s32.totalorder %s15, 1
      %s213 = scalar_select %p212, %s15, 1
      %s214 = smul.addr %s213, 8
      %s215 = scalar_lea.vmem %s3, %s214
      %p216 = pneg %p114
      %p217 = pneg %p111
      %p218 = pneg %p140
      %p219 = pneg %p137
      %p220 = scmp.lt.s32.totalorder %s15, 1
      %s221 = scalar_select %p220, %s15, 1
      %s222 = smul.addr %s221, 8
      %s223 = scalar_lea.vmem %s4, %s222
      %p224 = scmp.lt.s32.totalorder %s15, 1
      %s225 = scalar_select %p224, %s15, 1
      %s226 = smul.addr %s225, 8
      %s227 = scalar_lea.vmem %s0, %s226
      %p228 = scmp.lt.s32.totalorder %s15, 1
      %s229 = scalar_select %p228, %s15, 1
      %s230 = smul.addr %s229, 8
      %s231 = scalar_lea.vmem %s1, %s230
      %p232 = scmp.lt.s32.totalorder %s15, 1
      %s233 = scalar_select %p232, %s15, 1
      %s234 = smul.addr %s233, 8
      %s235 = scalar_lea.vmem %s2, %s234
      %p236 = scmp.lt.s32.totalorder %s15, 1
      %s237 = scalar_select %p236, %s15, 1
      %s238 = smul.addr %s237, 8
      %s239 = scalar_lea.vmem %s3, %s238
      %p240 = scmp.lt.s32.totalorder %s15, 1
      %s241 = scalar_select %p240, %s15, 1
      %s242 = smul.addr %s241, 8
      %s243 = scalar_lea.vmem %s4, %s242
      %v244 = vld [vmem:[%s227] sm:$0xff]
      %v245 = vld [vmem:[%s231] sm:$0xff]
      %v246 = vld [vmem:[%s235] sm:$0xff]
      %v247 = vld [vmem:[%s239] sm:$0xff]
      %vm248 = vcmp.eq.s32.totalorder %v247, 0
      %vm249 = vcmask 261120
      %v251 = vsel %vm249, %v244, 0
      %v254 = vsel %vm249, %v245, 0
      %256 = vmatprep.subr.mxu0 0.0
      %257 = vmatpush1.xpose.msra.mxu0 %v254
      %258 = vmatprep.subr.mxu0 0.0
      %259 = vmatpush1.xpose.msra.mxu0 0.0
      %260 = vmatprep.subr.mxu0 0.0
      %261 = vmatpush1.xpose.msra.mxu0 0.0
      %262 = vmatprep.subr.mxu0 0.0
      %263 = vmatpush1.xpose.msra.mxu0 0.0
      %264 = vmatprep.subr.mxu0 0.0
      %265 = vmatpush1.xpose.msra.mxu0 0.0
      %266 = vmatprep.subr.mxu0 0.0
      %267 = vmatpush1.xpose.msra.mxu0 0.0
      %268 = vmatprep.subr.mxu0 0.0
      %269 = vmatpush1.xpose.msra.mxu0 0.0
      %270 = vmatprep.subr.mxu0 0.0
      %271 = vmatpush1.xpose.msra.mxu0 0.0
      %272 = vmatprep.subr.mxu0 0.0
      %273 = vmatpush1.xpose.msra.mxu0 0.0
      %274 = vmatprep.subr.mxu0 0.0
      %275 = vmatpush1.xpose.msra.mxu0 0.0
      %276 = vmatprep.subr.mxu0 0.0
      %277 = vmatpush1.xpose.msra.mxu0 0.0
      %278 = vmatprep.subr.mxu0 0.0
      %279 = vmatpush1.xpose.msra.mxu0 0.0
      %280 = vmatprep.subr.mxu0 0.0
      %281 = vmatpush1.xpose.msra.mxu0 0.0
      %282 = vmatprep.subr.mxu0 0.0
      %283 = vmatpush1.xpose.msra.mxu0 0.0
      %284 = vmatprep.subr.mxu0 0.0
      %285 = vmatpush1.xpose.msra.mxu0 0.0
      %286 = vmatprep.subr.mxu0 0.0
      %287 = vmatpush1.xpose.msra.mxu0 0.0
      %288 = vmatprep.subr.mxu0 0.0
      %289 = vmatpush1.xpose.msra.mxu0 0.0
      %290 = vmatprep.subr.mxu0 0.0
      %291 = vmatpush1.xpose.msra.mxu0 0.0
      %292 = vmatprep.subr.mxu0 0.0
      %293 = vmatpush1.xpose.msra.mxu0 0.0
      %294 = vmatprep.subr.mxu0 0.0
      %295 = vmatpush1.xpose.msra.mxu0 0.0
      %296 = vmatprep.subr.mxu0 0.0
      %297 = vmatpush1.xpose.msra.mxu0 0.0
      %298 = vmatprep.subr.mxu0 0.0
      %299 = vmatpush1.xpose.msra.mxu0 0.0
      %300 = vmatprep.subr.mxu0 0.0
      %301 = vmatpush1.xpose.msra.mxu0 0.0
      %302 = vmatprep.subr.mxu0 0.0
      %303 = vmatpush1.xpose.msra.mxu0 0.0
      %304 = vmatprep.subr.mxu0 0.0
      %305 = vmatpush1.xpose.msra.mxu0 0.0
      %306 = vmatprep.subr.mxu0 0.0
      %307 = vmatpush1.xpose.msra.mxu0 0.0
      %308 = vmatprep.subr.mxu0 0.0
      %309 = vmatpush1.xpose.msra.mxu0 0.0
      %310 = vmatprep.subr.mxu0 0.0
      %311 = vmatpush1.xpose.msra.mxu0 0.0
      %312 = vmatprep.subr.mxu0 0.0
      %313 = vmatpush1.xpose.msra.mxu0 0.0
      %314 = vmatprep.subr.mxu0 0.0
      %315 = vmatpush1.xpose.msra.mxu0 0.0
      %316 = vmatprep.subr.mxu0 0.0
      %317 = vmatpush1.xpose.msra.mxu0 0.0
      %318 = vmatprep.subr.mxu0 0.0
      %319 = vmatpush1.xpose.msra.mxu0 0.0
      %320 = vmatprep.mubr.f32.mxu0 0.0
      %321 = vmatmul.mubr.f32.gmra.mrb[0].mxu0 %v251
      %v322 = vpop.f32.mrb[0].mxu0
      %v323 = vadd.f32 0.0, %v322
      %v324 = vpop.f32.mrb[0].mxu0
      %325 = vdwg.mxu0
      %v326 = vmul.f32 %v323, 0.17677669
      %v327 = vsel %vm248, -1e+09, %v326
      %vm328 = vcmask 64512
      %v329 = vsel %vm328, %v327, -inf
      %330 = vmax.xlane.f32.xlu0 %v329
      %v331 = vpop.xlane.xlu0 %330
      %v332 = vsub.f32 %v327, %v331
      %v333 = vmul.f32 %v332, 1.442695
      %v334 = vpow.pop %v333
      %v335 = vsel %vm328, %v334, 0.0
      %336 = vadd.xlane.f32.xlu0 %v335
      %v337 = vpop.xlane.xlu0 %336
      %v338 = vrcp.pop %v337
      %v339 = vmul.f32 %v334, %v338
      %v341 = vsel %vm328, %v339, 0
      %343 = vmatprep.subr.mxu0 0.0
      %344 = vmatpush1.msra.mxu0 %v246
      %345 = vmatprep.subr.mxu0 0.0
      %346 = vmatpush1.msra.mxu0 0.0
      %347 = vmatprep.subr.mxu0 0.0
      %348 = vmatpush1.msra.mxu0 0.0
      %349 = vmatprep.subr.mxu0 0.0
      %350 = vmatpush1.msra.mxu0 0.0
      %351 = vmatprep.subr.mxu0 0.0
      %352 = vmatpush1.msra.mxu0 0.0
      %353 = vmatprep.subr.mxu0 0.0
      %354 = vmatpush1.msra.mxu0 0.0
      %355 = vmatprep.subr.mxu0 0.0
      %356 = vmatpush1.msra.mxu0 0.0
      %357 = vmatprep.subr.mxu0 0.0
      %358 = vmatpush1.msra.mxu0 0.0
      %359 = vmatprep.subr.mxu0 0.0
      %360 = vmatpush1.msra.mxu0 0.0
      %361 = vmatprep.subr.mxu0 0.0
      %362 = vmatpush1.msra.mxu0 0.0
      %363 = vmatprep.subr.mxu0 0.0
      %364 = vmatpush1.msra.mxu0 0.0
      %365 = vmatprep.subr.mxu0 0.0
      %366 = vmatpush1.msra.mxu0 0.0
      %367 = vmatprep.subr.mxu0 0.0
      %368 = vmatpush1.msra.mxu0 0.0
      %369 = vmatprep.subr.mxu0 0.0
      %370 = vmatpush1.msra.mxu0 0.0
      %371 = vmatprep.subr.mxu0 0.0
      %372 = vmatpush1.msra.mxu0 0.0
      %373 = vmatprep.subr.mxu0 0.0
      %374 = vmatpush1.msra.mxu0 0.0
      %375 = vmatprep.subr.mxu0 0.0
      %376 = vmatpush1.msra.mxu0 0.0
      %377 = vmatprep.subr.mxu0 0.0
      %378 = vmatpush1.msra.mxu0 0.0
      %379 = vmatprep.subr.mxu0 0.0
      %380 = vmatpush1.msra.mxu0 0.0
      %381 = vmatprep.subr.mxu0 0.0
      %382 = vmatpush1.msra.mxu0 0.0
      %383 = vmatprep.subr.mxu0 0.0
      %384 = vmatpush1.msra.mxu0 0.0
      %385 = vmatprep.subr.mxu0 0.0
      %386 = vmatpush1.msra.mxu0 0.0
      %387 = vmatprep.subr.mxu0 0.0
      %388 = vmatpush1.msra.mxu0 0.0
      %389 = vmatprep.subr.mxu0 0.0
      %390 = vmatpush1.msra.mxu0 0.0
      %391 = vmatprep.subr.mxu0 0.0
      %392 = vmatpush1.msra.mxu0 0.0
      %393 = vmatprep.subr.mxu0 0.0
      %394 = vmatpush1.msra.mxu0 0.0
      %395 = vmatprep.subr.mxu0 0.0
      %396 = vmatpush1.msra.mxu0 0.0
      %397 = vmatprep.subr.mxu0 0.0
      %398 = vmatpush1.msra.mxu0 0.0
      %399 = vmatprep.subr.mxu0 0.0
      %400 = vmatpush1.msra.mxu0 0.0
      %401 = vmatprep.subr.mxu0 0.0
      %402 = vmatpush1.msra.mxu0 0.0
      %403 = vmatprep.subr.mxu0 0.0
      %404 = vmatpush1.msra.mxu0 0.0
      %405 = vmatprep.subr.mxu0 0.0
      %406 = vmatpush1.msra.mxu0 0.0
      %407 = vmatprep.mubr.f32.mxu0 0.0
      %408 = vmatmul.mubr.f32.gmra.mrb[0].mxu0 %v341
      %v409 = vpop.f32.mrb[0].mxu0
      %v410 = vadd.f32 0.0, %v409
      %v411 = vpop.f32.mrb[0].mxu0
      %412 = vdwg.mxu0
      %413 = vrot.lane.b32.xlu0 %v244, 96
      %v414 = vpop.permute.xlu0 %413
      %415 = vrot.lane.b32.xlu0 %v245, 96
      %v416 = vpop.permute.xlu0 %415
      %v417 = vsel %vm249, %v414, 0
      %v419 = vsel %vm249, %v416, 0
      %421 = vmatprep.subr.mxu0 0.0
      %422 = vmatpush1.xpose.msra.mxu0 %v419
      %423 = vmatprep.subr.mxu0 0.0
      %424 = vmatpush1.xpose.msra.mxu0 0.0
      %425 = vmatprep.subr.mxu0 0.0
      %426 = vmatpush1.xpose.msra.mxu0 0.0
      %427 = vmatprep.subr.mxu0 0.0
      %428 = vmatpush1.xpose.msra.mxu0 0.0
      %429 = vmatprep.subr.mxu0 0.0
      %430 = vmatpush1.xpose.msra.mxu0 0.0
      %431 = vmatprep.subr.mxu0 0.0
      %432 = vmatpush1.xpose.msra.mxu0 0.0
      %433 = vmatprep.subr.mxu0 0.0
      %434 = vmatpush1.xpose.msra.mxu0 0.0
      %435 = vmatprep.subr.mxu0 0.0
      %436 = vmatpush1.xpose.msra.mxu0 0.0
      %437 = vmatprep.subr.mxu0 0.0
      %438 = vmatpush1.xpose.msra.mxu0 0.0
      %439 = vmatprep.subr.mxu0 0.0
      %440 = vmatpush1.xpose.msra.mxu0 0.0
      %441 = vmatprep.subr.mxu0 0.0
      %442 = vmatpush1.xpose.msra.mxu0 0.0
      %443 = vmatprep.subr.mxu0 0.0
      %444 = vmatpush1.xpose.msra.mxu0 0.0
      %445 = vmatprep.subr.mxu0 0.0
      %446 = vmatpush1.xpose.msra.mxu0 0.0
      %447 = vmatprep.subr.mxu0 0.0
      %448 = vmatpush1.xpose.msra.mxu0 0.0
      %449 = vmatprep.subr.mxu0 0.0
      %450 = vmatpush1.xpose.msra.mxu0 0.0
      %451 = vmatprep.subr.mxu0 0.0
      %452 = vmatpush1.xpose.msra.mxu0 0.0
      %453 = vmatprep.subr.mxu0 0.0
      %454 = vmatpush1.xpose.msra.mxu0 0.0
      %455 = vmatprep.subr.mxu0 0.0
      %456 = vmatpush1.xpose.msra.mxu0 0.0
      %457 = vmatprep.subr.mxu0 0.0
      %458 = vmatpush1.xpose.msra.mxu0 0.0
      %459 = vmatprep.subr.mxu0 0.0
      %460 = vmatpush1.xpose.msra.mxu0 0.0
      %461 = vmatprep.subr.mxu0 0.0
      %462 = vmatpush1.xpose.msra.mxu0 0.0
      %463 = vmatprep.subr.mxu0 0.0
      %464 = vmatpush1.xpose.msra.mxu0 0.0
      %465 = vmatprep.subr.mxu0 0.0
      %466 = vmatpush1.xpose.msra.mxu0 0.0
      %467 = vmatprep.subr.mxu0 0.0
      %468 = vmatpush1.xpose.msra.mxu0 0.0
      %469 = vmatprep.subr.mxu0 0.0
      %470 = vmatpush1.xpose.msra.mxu0 0.0
      %471 = vmatprep.subr.mxu0 0.0
      %472 = vmatpush1.xpose.msra.mxu0 0.0
      %473 = vmatprep.subr.mxu0 0.0
      %474 = vmatpush1.xpose.msra.mxu0 0.0
      %475 = vmatprep.subr.mxu0 0.0
      %476 = vmatpush1.xpose.msra.mxu0 0.0
      %477 = vmatprep.subr.mxu0 0.0
      %478 = vmatpush1.xpose.msra.mxu0 0.0
      %479 = vmatprep.subr.mxu0 0.0
      %480 = vmatpush1.xpose.msra.mxu0 0.0
      %481 = vmatprep.subr.mxu0 0.0
      %482 = vmatpush1.xpose.msra.mxu0 0.0
      %483 = vmatprep.subr.mxu0 0.0
      %484 = vmatpush1.xpose.msra.mxu0 0.0
      %485 = vmatprep.mubr.f32.mxu0 0.0
      %486 = vmatmul.mubr.f32.gmra.mrb[0].mxu0 %v417
      %v487 = vpop.f32.mrb[0].mxu0
      %v488 = vadd.f32 0.0, %v487
      %v489 = vpop.f32.mrb[0].mxu0
      %490 = vdwg.mxu0
      %v491 = vmul.f32 %v488, 0.17677669
      %v492 = vsel %vm248, -1e+09, %v491
      %v493 = vsel %vm328, %v492, -inf
      %494 = vmax.xlane.f32.xlu0 %v493
      %v495 = vpop.xlane.xlu0 %494
      %v496 = vsub.f32 %v492, %v495
      %v497 = vmul.f32 %v496, 1.442695
      %v498 = vpow.pop %v497
      %v499 = vsel %vm328, %v498, 0.0
      %500 = vadd.xlane.f32.xlu0 %v499
      %v501 = vpop.xlane.xlu0 %500
      %v502 = vrcp.pop %v501
      %v503 = vmul.f32 %v498, %v502
      %505 = vrot.lane.b32.xlu0 %v246, 96
      %v506 = vpop.permute.xlu0 %505
      %v509 = vsel %vm328, %v503, 0
      %511 = vmatprep.subr.mxu0 0.0
      %512 = vmatpush1.msra.mxu0 %v506
      %513 = vmatprep.subr.mxu0 0.0
      %514 = vmatpush1.msra.mxu0 0.0
      %515 = vmatprep.subr.mxu0 0.0
      %516 = vmatpush1.msra.mxu0 0.0
      %517 = vmatprep.subr.mxu0 0.0
      %518 = vmatpush1.msra.mxu0 0.0
      %519 = vmatprep.subr.mxu0 0.0
      %520 = vmatpush1.msra.mxu0 0.0
      %521 = vmatprep.subr.mxu0 0.0
      %522 = vmatpush1.msra.mxu0 0.0
      %523 = vmatprep.subr.mxu0 0.0
      %524 = vmatpush1.msra.mxu0 0.0
      %525 = vmatprep.subr.mxu0 0.0
      %526 = vmatpush1.msra.mxu0 0.0
      %527 = vmatprep.subr.mxu0 0.0
      %528 = vmatpush1.msra.mxu0 0.0
      %529 = vmatprep.subr.mxu0 0.0
      %530 = vmatpush1.msra.mxu0 0.0
      %531 = vmatprep.subr.mxu0 0.0
      %532 = vmatpush1.msra.mxu0 0.0
      %533 = vmatprep.subr.mxu0 0.0
      %534 = vmatpush1.msra.mxu0 0.0
      %535 = vmatprep.subr.mxu0 0.0
      %536 = vmatpush1.msra.mxu0 0.0
      %537 = vmatprep.subr.mxu0 0.0
      %538 = vmatpush1.msra.mxu0 0.0
      %539 = vmatprep.subr.mxu0 0.0
      %540 = vmatpush1.msra.mxu0 0.0
      %541 = vmatprep.subr.mxu0 0.0
      %542 = vmatpush1.msra.mxu0 0.0
      %543 = vmatprep.subr.mxu0 0.0
      %544 = vmatpush1.msra.mxu0 0.0
      %545 = vmatprep.subr.mxu0 0.0
      %546 = vmatpush1.msra.mxu0 0.0
      %547 = vmatprep.subr.mxu0 0.0
      %548 = vmatpush1.msra.mxu0 0.0
      %549 = vmatprep.subr.mxu0 0.0
      %550 = vmatpush1.msra.mxu0 0.0
      %551 = vmatprep.subr.mxu0 0.0
      %552 = vmatpush1.msra.mxu0 0.0
      %553 = vmatprep.subr.mxu0 0.0
      %554 = vmatpush1.msra.mxu0 0.0
      %555 = vmatprep.subr.mxu0 0.0
      %556 = vmatpush1.msra.mxu0 0.0
      %557 = vmatprep.subr.mxu0 0.0
      %558 = vmatpush1.msra.mxu0 0.0
      %559 = vmatprep.subr.mxu0 0.0
      %560 = vmatpush1.msra.mxu0 0.0
      %561 = vmatprep.subr.mxu0 0.0
      %562 = vmatpush1.msra.mxu0 0.0
      %563 = vmatprep.subr.mxu0 0.0
      %564 = vmatpush1.msra.mxu0 0.0
      %565 = vmatprep.subr.mxu0 0.0
      %566 = vmatpush1.msra.mxu0 0.0
      %567 = vmatprep.subr.mxu0 0.0
      %568 = vmatpush1.msra.mxu0 0.0
      %569 = vmatprep.subr.mxu0 0.0
      %570 = vmatpush1.msra.mxu0 0.0
      %571 = vmatprep.subr.mxu0 0.0
      %572 = vmatpush1.msra.mxu0 0.0
      %573 = vmatprep.subr.mxu0 0.0
      %574 = vmatpush1.msra.mxu0 0.0
      %575 = vmatprep.mubr.f32.mxu0 0.0
      %576 = vmatmul.mubr.f32.gmra.mrb[0].mxu0 %v509
      %v577 = vpop.f32.mrb[0].mxu0
      %v578 = vadd.f32 0.0, %v577
      %v579 = vpop.f32.mrb[0].mxu0
      %580 = vdwg.mxu0
      %582 = vrot.lane.b32.xlu0 %v578, 32
      %v583 = vpop.permute.xlu0 %582
      %v585 = vsel %vm249, %v410, %v583
      %vm586 = vcmask 523264
      %587 = vst.msk [vmem:[%s243] sm:$0xff] %vm586, %v585
      %p588 = scmp.lt.s32.totalorder %s15, 1
      %s589 = scalar_select %p588, %s15, 1
      %s590 = smul.addr %s589, 8
      %s591 = scalar_lea.vmem %s4, %s590
      // Predicated region
      $region37: #{_lambda_.17} parent=35 // pred_check
        %p592 = pneg %p137
      $region38: #{_lambda_.17} parent=35 // pred_check_branch
        %594 = sbr.rel (%p592) target = $region40
      $region39: #{_lambda_.17} parent=35 // pred_region
        _
      $region40: #{_lambda_.17} parent=35 // pred_fallthru
        _
    $region36: #{_lambda_.17} parent=5 // pred_fallthru
      _
    %p595 = scmp.le.s32.totalorder 2, %s10
    // Predicated region
    $region41: #{_lambda_.17} parent=5 // pred_check
      %p596 = pneg %p595
    $region42: #{_lambda_.17} parent=5 // pred_check_branch
      %598 = sbr.rel (%p596) target = $region44
    $region43: #{_lambda_.17} parent=5 // pred_region
      %s599 = ssub.s32 %s10, 2
      // Predicated region
      $region45: #{_lambda_.17} parent=43 // pred_check
        %p600 = pneg %p143
      $region46: #{_lambda_.17} parent=43 // pred_check_branch
        %602 = sbr.rel (%p600) target = $region48
      $region47: #{_lambda_.17} parent=43 // pred_region
        %p603 = scmp.lt.s32.totalorder %s16, 1
        %s604 = scalar_select %p603, %s16, 1
        %s605 = smul.addr %s604, 8
        %s606 = scalar_lea.vmem %s4, %s605
      $region48: #{_lambda_.17} parent=43 // pred_fallthru
        _
    $region44: #{_lambda_.17} parent=5 // pred_fallthru
      _
  $region6: #{_lambda_.17} parent=0 // loop_footer
    %s14 = sadd.s32 1, %s10
  $region7: #{_lambda_.17} parent=0 // loop_footer_branch
    %9 = sbr.rel target = $region3
  $region8: #{_lambda_.17} parent=0 // loop_exit
    _

// kernel: _lambda_.18
$region0: #{_lambda_.18}
  #allocation0 [shape = 'u32[]', space=smem, size = 0x4, offset = 0x4, fixed_abs, tag = 'smem constant byte address 0x4 - core index']
  #allocation1 [shape = 'u32[144,128]{1,0:T(1,128)}', space=vmem, size = 0x12000, scoped, tag = 'internal scratch']
  %s0 = inlined_call_operand.vmem [shape: f32[16,64], index: 0, kind: input, shape index: {}]
  %s1 = inlined_call_operand.vmem [shape: f32[16,32], index: 1, kind: input, shape index: {}]
  %s2 = inlined_call_operand.vmem [shape: f32[64,32], index: 2, kind: input, shape index: {}]
  %s3 = inlined_call_operand.vmem [shape: f32[1,32], index: 3, kind: input, shape index: {}]
  %s4 = inlined_call_operand.vmem [shape: f32[16,32], index: 4, kind: output, shape index: {}]
  %s5 = sld [smem:[#allocation0]]
  $region26: #{_lambda_.18} parent=0
    _
  %s7 = ssub.s32 1, %s5
  %s8 = scalar_select 0, %s7, %s5
  // Predicated region
  $region2: #{_lambda_.18} parent=0 // pred_check
    _
  $region3: #{_lambda_.18} parent=0 // pred_check_branch
    %10 = sbr.rel (0) target = $region5
  $region4: #{_lambda_.18} parent=0 // pred_region
    _
  $region5: #{_lambda_.18} parent=0 // pred_fallthru
    _
  // Predicated region
  $region6: #{_lambda_.18} parent=0 // pred_check
    _
  $region7: #{_lambda_.18} parent=0 // pred_check_branch
    %12 = sbr.rel (0) target = $region9
  $region8: #{_lambda_.18} parent=0 // pred_region
    _
  $region9: #{_lambda_.18} parent=0 // pred_fallthru
    _
  // Predicated region
  $region10: #{_lambda_.18} parent=0 // pred_check
    _
  $region11: #{_lambda_.18} parent=0 // pred_check_branch
    %14 = sbr.rel (0) target = $region13
  $region12: #{_lambda_.18} parent=0 // pred_region
    _
  $region13: #{_lambda_.18} parent=0 // pred_fallthru
    _
  // Predicated region
  $region14: #{_lambda_.18} parent=0 // pred_check
    _
  $region15: #{_lambda_.18} parent=0 // pred_check_branch
    %16 = sbr.rel (0) target = $region17
  $region16: #{_lambda_.18} parent=0 // pred_region
    _
  $region17: #{_lambda_.18} parent=0 // pred_fallthru
    _
  %v17 = vld [vmem:[%s0] sm:$0xff]
  %v18 = vld [vmem:[%s0 + $0x8] sm:$0xff]
  %v19 = vld [vmem:[%s2] sm:$0xff]
  %v20 = vld [vmem:[%s2 + $0x8] sm:$0xff]
  %v21 = vld [vmem:[%s2 + $0x10] sm:$0xff]
  %v22 = vld [vmem:[%s2 + $0x18] sm:$0xff]
  %v23 = vld [vmem:[%s2 + $0x20] sm:$0xff]
  %v24 = vld [vmem:[%s2 + $0x28] sm:$0xff]
  %v25 = vld [vmem:[%s2 + $0x30] sm:$0xff]
  %v26 = vld [vmem:[%s2 + $0x38] sm:$0xff]
  %v27 = vld [vmem:[%s3] sm:$0x1]
  %v29 = vlaneseq
  %v30 = vshrl.u32 %v29, 7
  %v31 = vsub.s32 0, %v30
  %v32 = vrot.slane %v27, %v31
  %vm34 = vcmask 523264
  %v36 = vsel %vm34, %v17, 0
  %v39 = vsel %vm34, %v18, 0
  %41 = vmatprep.subr.mxu0 0.0
  %42 = vmatpush1.msra.mxu0 %v19
  %43 = vmatprep.subr.mxu0 0.0
  %44 = vmatpush1.msra.mxu0 %v20
  %45 = vmatprep.subr.mxu0 0.0
  %46 = vmatpush1.msra.mxu0 %v21
  %47 = vmatprep.subr.mxu0 0.0
  %48 = vmatpush1.msra.mxu0 %v22
  %49 = vmatprep.subr.mxu0 0.0
  %50 = vmatpush1.msra.mxu0 %v23
  %51 = vmatprep.subr.mxu0 0.0
  %52 = vmatpush1.msra.mxu0 %v24
  %53 = vmatprep.subr.mxu0 0.0
  %54 = vmatpush1.msra.mxu0 %v25
  %55 = vmatprep.subr.mxu0 0.0
  %56 = vmatpush1.msra.mxu0 %v26
  %57 = vmatprep.subr.mxu0 0.0
  %58 = vmatpush1.msra.mxu0 0.0
  %59 = vmatprep.subr.mxu0 0.0
  %60 = vmatpush1.msra.mxu0 0.0
  %61 = vmatprep.subr.mxu0 0.0
  %62 = vmatpush1.msra.mxu0 0.0
  %63 = vmatprep.subr.mxu0 0.0
  %64 = vmatpush1.msra.mxu0 0.0
  %65 = vmatprep.subr.mxu0 0.0
  %66 = vmatpush1.msra.mxu0 0.0
  %67 = vmatprep.subr.mxu0 0.0
  %68 = vmatpush1.msra.mxu0 0.0
  %69 = vmatprep.subr.mxu0 0.0
  %70 = vmatpush1.msra.mxu0 0.0
  %71 = vmatprep.subr.mxu0 0.0
  %72 = vmatpush1.msra.mxu0 0.0
  %73 = vmatprep.subr.mxu0 0.0
  %74 = vmatpush1.msra.mxu0 0.0
  %75 = vmatprep.subr.mxu0 0.0
  %76 = vmatpush1.msra.mxu0 0.0
  %77 = vmatprep.subr.mxu0 0.0
  %78 = vmatpush1.msra.mxu0 0.0
  %79 = vmatprep.subr.mxu0 0.0
  %80 = vmatpush1.msra.mxu0 0.0
  %81 = vmatprep.subr.mxu0 0.0
  %82 = vmatpush1.msra.mxu0 0.0
  %83 = vmatprep.subr.mxu0 0.0
  %84 = vmatpush1.msra.mxu0 0.0
  %85 = vmatprep.subr.mxu0 0.0
  %86 = vmatpush1.msra.mxu0 0.0
  %87 = vmatprep.subr.mxu0 0.0
  %88 = vmatpush1.msra.mxu0 0.0
  %89 = vmatprep.subr.mxu0 0.0
  %90 = vmatpush1.msra.mxu0 0.0
  %91 = vmatprep.subr.mxu0 0.0
  %92 = vmatpush1.msra.mxu0 0.0
  %93 = vmatprep.subr.mxu0 0.0
  %94 = vmatpush1.msra.mxu0 0.0
  %95 = vmatprep.subr.mxu0 0.0
  %96 = vmatpush1.msra.mxu0 0.0
  %97 = vmatprep.subr.mxu0 0.0
  %98 = vmatpush1.msra.mxu0 0.0
  %99 = vmatprep.subr.mxu0 0.0
  %100 = vmatpush1.msra.mxu0 0.0
  %101 = vmatprep.subr.mxu0 0.0
  %102 = vmatpush1.msra.mxu0 0.0
  %103 = vmatprep.subr.mxu0 0.0
  %104 = vmatpush1.msra.mxu0 0.0
  %105 = vmatprep.mubr.f32.mxu0 0.0
  %106 = vmatmul.mubr.f32.gmra.mrb[0].mxu0 %v36
  %v107 = vpop.f32.mrb[0].mxu0
  %v108 = vadd.f32 %v32, %v107
  %v109 = vpop.f32.mrb[0].mxu0
  %110 = vmatprep.mubr.f32.mxu0 0.0
  %111 = vmatmul.mubr.f32.gmra.mrb[0].mxu0 %v39
  %v112 = vpop.f32.mrb[0].mxu0
  %v113 = vadd.f32 %v32, %v112
  %v114 = vpop.f32.mrb[0].mxu0
  %115 = vdwg.mxu0
  %v116 = vld [vmem:[%s1] sm:$0xff]
  %v117 = vld [vmem:[%s1 + $0x8] sm:$0xff]
  %v118 = vadd.f32 %v108, %v116
  %v119 = vadd.f32 %v113, %v117
  %vm120 = vcmask 261120
  %121 = vst.msk [vmem:[%s4] sm:$0xff] %vm120, %v118
  %122 = vst.msk [vmem:[%s4 + $0x8] sm:$0xff] %vm120, %v119
  // Predicated region
  $region18: #{_lambda_.18} parent=0 // pred_check
    _
  $region19: #{_lambda_.18} parent=0 // pred_check_branch
    %124 = sbr.rel (0) target = $region21
  $region20: #{_lambda_.18} parent=0 // pred_region
    _
  $region21: #{_lambda_.18} parent=0 // pred_fallthru
    _
  // Predicated region
  $region22: #{_lambda_.18} parent=0 // pred_check
    _
  $region23: #{_lambda_.18} parent=0 // pred_check_branch
    %126 = sbr.rel (0) target = $region25
  $region24: #{_lambda_.18} parent=0 // pred_region
    _
  $region25: #{_lambda_.18} parent=0 // pred_fallthru
    _

// kernel: _lambda_.19
$region0: #{_lambda_.19}
  #allocation0 [shape = 'u32[]', space=smem, size = 0x4, offset = 0x4, fixed_abs, tag = 'smem constant byte address 0x4 - core index']
  #allocation1 [shape = 'u32[144,128]{1,0:T(1,128)}', space=vmem, size = 0x12000, scoped, tag = 'internal scratch']
  %s0 = inlined_call_operand.vmem [shape: f32[16,32], index: 0, kind: input, shape index: {}]
  %s1 = inlined_call_operand.vmem [shape: f32[1,32], index: 1, kind: input, shape index: {}]
  %s2 = inlined_call_operand.vmem [shape: f32[1,32], index: 2, kind: input, shape index: {}]
  %s3 = inlined_call_operand.vmem [shape: f32[32,64], index: 3, kind: input, shape index: {}]
  %s4 = inlined_call_operand.vmem [shape: f32[1,64], index: 4, kind: input, shape index: {}]
  %s5 = inlined_call_operand.vmem [shape: f32[16,64], index: 5, kind: output, shape index: {}]
  %s6 = sld [smem:[#allocation0]]
  $region30: #{_lambda_.19} parent=0
    _
  %s8 = ssub.s32 1, %s6
  %s9 = scalar_select 0, %s8, %s6
  // Predicated region
  $region2: #{_lambda_.19} parent=0 // pred_check
    _
  $region3: #{_lambda_.19} parent=0 // pred_check_branch
    %11 = sbr.rel (0) target = $region5
  $region4: #{_lambda_.19} parent=0 // pred_region
    _
  $region5: #{_lambda_.19} parent=0 // pred_fallthru
    _
  // Predicated region
  $region6: #{_lambda_.19} parent=0 // pred_check
    _
  $region7: #{_lambda_.19} parent=0 // pred_check_branch
    %13 = sbr.rel (0) target = $region9
  $region8: #{_lambda_.19} parent=0 // pred_region
    _
  $region9: #{_lambda_.19} parent=0 // pred_fallthru
    _
  // Predicated region
  $region10: #{_lambda_.19} parent=0 // pred_check
    _
  $region11: #{_lambda_.19} parent=0 // pred_check_branch
    %15 = sbr.rel (0) target = $region13
  $region12: #{_lambda_.19} parent=0 // pred_region
    _
  $region13: #{_lambda_.19} parent=0 // pred_fallthru
    _
  // Predicated region
  $region14: #{_lambda_.19} parent=0 // pred_check
    _
  $region15: #{_lambda_.19} parent=0 // pred_check_branch
    %17 = sbr.rel (0) target = $region17
  $region16: #{_lambda_.19} parent=0 // pred_region
    _
  $region17: #{_lambda_.19} parent=0 // pred_fallthru
    _
  // Predicated region
  $region18: #{_lambda_.19} parent=0 // pred_check
    _
  $region19: #{_lambda_.19} parent=0 // pred_check_branch
    %19 = sbr.rel (0) target = $region21
  $region20: #{_lambda_.19} parent=0 // pred_region
    _
  $region21: #{_lambda_.19} parent=0 // pred_fallthru
    _
  %v20 = vld [vmem:[%s0] sm:$0xff]
  %v21 = vld [vmem:[%s0 + $0x8] sm:$0xff]
  %v22 = vld [vmem:[%s1] sm:$0x1]
  %v23 = vld [vmem:[%s2] sm:$0x1]
  %vm24 = vcmask 261120
  %v25 = vsel %vm24, %v20, 0.0
  %26 = vadd.xlane.f32.xlu0 %v25
  %v27 = vpop.xlane.xlu0 %26
  %v28 = vsel %vm24, %v21, 0.0
  %29 = vadd.xlane.f32.xlu0 %v28
  %v30 = vpop.xlane.xlu0 %29
  %v31 = vrcp.pop 32.0
  %v32 = vmul.f32 %v27, %v31
  %v33 = vmul.f32 %v30, %v31
  %v34 = vsub.f32 %v20, %v32
  %v35 = vsub.f32 %v21, %v33
  %v36 = vmul.f32 %v34, %v34
  %v37 = vmul.f32 %v35, %v35
  %v38 = vsel %vm24, %v36, 0.0
  %39 = vadd.xlane.f32.xlu0 %v38
  %v40 = vpop.xlane.xlu0 %39
  %v41 = vsel %vm24, %v37, 0.0
  %42 = vadd.xlane.f32.xlu0 %v41
  %v43 = vpop.xlane.xlu0 %42
  %v44 = vrcp.pop 31.0
  %v45 = vmul.f32 %v40, %v44
  %v46 = vmul.f32 %v43, %v44
  %v47 = vrsqrt.pop %v45
  %v48 = vmul.f32 %v45, %v47
  %vm49 = vcmp.eq.f32.partialorder %v45, inf
  %v50 = vsel %vm49, %v45, %v48
  %vm51 = vcmp.eq.f32.partialorder %v45, 0.0
  %v52 = vand.u32 %v45, 2147483648
  %v53 = vsel %vm51, %v52, %v50
  %v54 = vrsqrt.pop %v46
  %v55 = vmul.f32 %v46, %v54
  %vm56 = vcmp.eq.f32.partialorder %v46, inf
  %v57 = vsel %vm56, %v46, %v55
  %vm58 = vcmp.eq.f32.partialorder %v46, 0.0
  %v59 = vand.u32 %v46, 2147483648
  %v60 = vsel %vm58, %v59, %v57
  %v62 = vlaneseq
  %v63 = vshrl.u32 %v62, 7
  %v64 = vsub.s32 0, %v63
  %v65 = vrot.slane %v22, %v64
  %v67 = vmul.f32 %v65, %v34
  %v68 = vmul.f32 %v65, %v35
  %v69 = vadd.f32 %v53, 1e-06
  %v70 = vadd.f32 %v60, 1e-06
  %v71 = vrcp.pop %v69
  %v72 = vmul.f32 %v67, %v71
  %v73 = vrcp.pop %v70
  %v74 = vmul.f32 %v68, %v73
  %v76 = vlaneseq
  %v77 = vshrl.u32 %v76, 7
  %v78 = vsub.s32 0, %v77
  %v79 = vrot.slane %v23, %v78
  %v81 = vadd.f32 %v72, %v79
  %v82 = vadd.f32 %v74, %v79
  %v83 = vld [vmem:[%s3] sm:$0xff]
  %v84 = vld [vmem:[%s3 + $0x8] sm:$0xff]
  %v85 = vld [vmem:[%s3 + $0x10] sm:$0xff]
  %v86 = vld [vmem:[%s3 + $0x18] sm:$0xff]
  %v87 = vld [vmem:[%s4] sm:$0x1]
  %v89 = vlaneseq
  %v90 = vshrl.u32 %v89, 7
  %v91 = vsub.s32 0, %v90
  %v92 = vrot.slane %v87, %v91
  %v95 = vsel %vm24, %v81, 0
  %v98 = vsel %vm24, %v82, 0
  %100 = vmatprep.subr.mxu0 0.0
  %101 = vmatpush1.msra.mxu0 %v83
  %102 = vmatprep.subr.mxu0 0.0
  %103 = vmatpush1.msra.mxu0 %v84
  %104 = vmatprep.subr.mxu0 0.0
  %105 = vmatpush1.msra.mxu0 %v85
  %106 = vmatprep.subr.mxu0 0.0
  %107 = vmatpush1.msra.mxu0 %v86
  %108 = vmatprep.subr.mxu0 0.0
  %109 = vmatpush1.msra.mxu0 0.0
  %110 = vmatprep.subr.mxu0 0.0
  %111 = vmatpush1.msra.mxu0 0.0
  %112 = vmatprep.subr.mxu0 0.0
  %113 = vmatpush1.msra.mxu0 0.0
  %114 = vmatprep.subr.mxu0 0.0
  %115 = vmatpush1.msra.mxu0 0.0
  %116 = vmatprep.subr.mxu0 0.0
  %117 = vmatpush1.msra.mxu0 0.0
  %118 = vmatprep.subr.mxu0 0.0
  %119 = vmatpush1.msra.mxu0 0.0
  %120 = vmatprep.subr.mxu0 0.0
  %121 = vmatpush1.msra.mxu0 0.0
  %122 = vmatprep.subr.mxu0 0.0
  %123 = vmatpush1.msra.mxu0 0.0
  %124 = vmatprep.subr.mxu0 0.0
  %125 = vmatpush1.msra.mxu0 0.0
  %126 = vmatprep.subr.mxu0 0.0
  %127 = vmatpush1.msra.mxu0 0.0
  %128 = vmatprep.subr.mxu0 0.0
  %129 = vmatpush1.msra.mxu0 0.0
  %130 = vmatprep.subr.mxu0 0.0
  %131 = vmatpush1.msra.mxu0 0.0
  %132 = vmatprep.subr.mxu0 0.0
  %133 = vmatpush1.msra.mxu0 0.0
  %134 = vmatprep.subr.mxu0 0.0
  %135 = vmatpush1.msra.mxu0 0.0
  %136 = vmatprep.subr.mxu0 0.0
  %137 = vmatpush1.msra.mxu0 0.0
  %138 = vmatprep.subr.mxu0 0.0
  %139 = vmatpush1.msra.mxu0 0.0
  %140 = vmatprep.subr.mxu0 0.0
  %141 = vmatpush1.msra.mxu0 0.0
  %142 = vmatprep.subr.mxu0 0.0
  %143 = vmatpush1.msra.mxu0 0.0
  %144 = vmatprep.subr.mxu0 0.0
  %145 = vmatpush1.msra.mxu0 0.0
  %146 = vmatprep.subr.mxu0 0.0
  %147 = vmatpush1.msra.mxu0 0.0
  %148 = vmatprep.subr.mxu0 0.0
  %149 = vmatpush1.msra.mxu0 0.0
  %150 = vmatprep.subr.mxu0 0.0
  %151 = vmatpush1.msra.mxu0 0.0
  %152 = vmatprep.subr.mxu0 0.0
  %153 = vmatpush1.msra.mxu0 0.0
  %154 = vmatprep.subr.mxu0 0.0
  %155 = vmatpush1.msra.mxu0 0.0
  %156 = vmatprep.subr.mxu0 0.0
  %157 = vmatpush1.msra.mxu0 0.0
  %158 = vmatprep.subr.mxu0 0.0
  %159 = vmatpush1.msra.mxu0 0.0
  %160 = vmatprep.subr.mxu0 0.0
  %161 = vmatpush1.msra.mxu0 0.0
  %162 = vmatprep.subr.mxu0 0.0
  %163 = vmatpush1.msra.mxu0 0.0
  %164 = vmatprep.mubr.f32.mxu0 0.0
  %165 = vmatmul.mubr.f32.gmra.mrb[0].mxu0 %v95
  %v166 = vpop.f32.mrb[0].mxu0
  %v167 = vadd.f32 %v92, %v166
  %v168 = vpop.f32.mrb[0].mxu0
  %169 = vmatprep.mubr.f32.mxu0 0.0
  %170 = vmatmul.mubr.f32.gmra.mrb[0].mxu0 %v98
  %v171 = vpop.f32.mrb[0].mxu0
  %v172 = vadd.f32 %v92, %v171
  %v173 = vpop.f32.mrb[0].mxu0
  %174 = vdwg.mxu0
  %vm175 = vcmask 523264
  %176 = vst.msk [vmem:[%s5] sm:$0xff] %vm175, %v167
  %177 = vst.msk [vmem:[%s5 + $0x8] sm:$0xff] %vm175, %v172
  // Predicated region
  $region22: #{_lambda_.19} parent=0 // pred_check
    _
  $region23: #{_lambda_.19} parent=0 // pred_check_branch
    %179 = sbr.rel (0) target = $region25
  $region24: #{_lambda_.19} parent=0 // pred_region
    _
  $region25: #{_lambda_.19} parent=0 // pred_fallthru
    _
  // Predicated region
  $region26: #{_lambda_.19} parent=0 // pred_check
    _
  $region27: #{_lambda_.19} parent=0 // pred_check_branch
    %181 = sbr.rel (0) target = $region29
  $region28: #{_lambda_.19} parent=0 // pred_region
    _
  $region29: #{_lambda_.19} parent=0 // pred_fallthru
    _

// kernel: _lambda_.20
$region0: #{_lambda_.20}
  #allocation0 [shape = 'u32[]', space=smem, size = 0x4, offset = 0x4, fixed_abs, tag = 'smem constant byte address 0x4 - core index']
  #allocation1 [shape = 'u32[144,128]{1,0:T(1,128)}', space=vmem, size = 0x12000, scoped, tag = 'internal scratch']
  %s0 = inlined_call_operand.vmem [shape: f32[16,32], index: 0, kind: input, shape index: {}]
  %s1 = inlined_call_operand.vmem [shape: f32[32,128], index: 1, kind: input, shape index: {}]
  %s2 = inlined_call_operand.vmem [shape: f32[1,128], index: 2, kind: input, shape index: {}]
  %s3 = inlined_call_operand.vmem [shape: f32[16,64], index: 3, kind: output, shape index: {0}]
  %s4 = inlined_call_operand.vmem [shape: f32[16,64], index: 4, kind: output, shape index: {1}]
  %5 = xla_tuple %s3, %s4
  %s6 = sld [smem:[#allocation0]]
  $region30: #{_lambda_.20} parent=0
    _
  %s8 = ssub.s32 1, %s6
  %s9 = scalar_select 0, %s8, %s6
  // Predicated region
  $region2: #{_lambda_.20} parent=0 // pred_check
    _
  $region3: #{_lambda_.20} parent=0 // pred_check_branch
    %11 = sbr.rel (0) target = $region5
  $region4: #{_lambda_.20} parent=0 // pred_region
    _
  $region5: #{_lambda_.20} parent=0 // pred_fallthru
    _
  // Predicated region
  $region6: #{_lambda_.20} parent=0 // pred_check
    _
  $region7: #{_lambda_.20} parent=0 // pred_check_branch
    %13 = sbr.rel (0) target = $region9
  $region8: #{_lambda_.20} parent=0 // pred_region
    _
  $region9: #{_lambda_.20} parent=0 // pred_fallthru
    _
  // Predicated region
  $region10: #{_lambda_.20} parent=0 // pred_check
    _
  $region11: #{_lambda_.20} parent=0 // pred_check_branch
    %15 = sbr.rel (0) target = $region13
  $region12: #{_lambda_.20} parent=0 // pred_region
    _
  $region13: #{_lambda_.20} parent=0 // pred_fallthru
    _
  %v16 = vld [vmem:[%s0] sm:$0xff]
  %v17 = vld [vmem:[%s0 + $0x8] sm:$0xff]
  %v18 = vld [vmem:[%s1] sm:$0xff]
  %v19 = vld [vmem:[%s1 + $0x8] sm:$0xff]
  %v20 = vld [vmem:[%s1 + $0x10] sm:$0xff]
  %v21 = vld [vmem:[%s1 + $0x18] sm:$0xff]
  %v22 = vld [vmem:[%s2] sm:$0x1]
  %v24 = vlaneseq
  %v25 = vshrl.u32 %v24, 7
  %v26 = vsub.s32 0, %v25
  %v27 = vrot.slane %v22, %v26
  %vm29 = vcmask 261120
  %v31 = vsel %vm29, %v16, 0
  %v34 = vsel %vm29, %v17, 0
  %36 = vmatprep.subr.mxu0 0.0
  %37 = vmatpush1.msra.mxu0 %v18
  %38 = vmatprep.subr.mxu0 0.0
  %39 = vmatpush1.msra.mxu0 %v19
  %40 = vmatprep.subr.mxu0 0.0
  %41 = vmatpush1.msra.mxu0 %v20
  %42 = vmatprep.subr.mxu0 0.0
  %43 = vmatpush1.msra.mxu0 %v21
  %44 = vmatprep.subr.mxu0 0.0
  %45 = vmatpush1.msra.mxu0 0.0
  %46 = vmatprep.subr.mxu0 0.0
  %47 = vmatpush1.msra.mxu0 0.0
  %48 = vmatprep.subr.mxu0 0.0
  %49 = vmatpush1.msra.mxu0 0.0
  %50 = vmatprep.subr.mxu0 0.0
  %51 = vmatpush1.msra.mxu0 0.0
  %52 = vmatprep.subr.mxu0 0.0
  %53 = vmatpush1.msra.mxu0 0.0
  %54 = vmatprep.subr.mxu0 0.0
  %55 = vmatpush1.msra.mxu0 0.0
  %56 = vmatprep.subr.mxu0 0.0
  %57 = vmatpush1.msra.mxu0 0.0
  %58 = vmatprep.subr.mxu0 0.0
  %59 = vmatpush1.msra.mxu0 0.0
  %60 = vmatprep.subr.mxu0 0.0
  %61 = vmatpush1.msra.mxu0 0.0
  %62 = vmatprep.subr.mxu0 0.0
  %63 = vmatpush1.msra.mxu0 0.0
  %64 = vmatprep.subr.mxu0 0.0
  %65 = vmatpush1.msra.mxu0 0.0
  %66 = vmatprep.subr.mxu0 0.0
  %67 = vmatpush1.msra.mxu0 0.0
  %68 = vmatprep.subr.mxu0 0.0
  %69 = vmatpush1.msra.mxu0 0.0
  %70 = vmatprep.subr.mxu0 0.0
  %71 = vmatpush1.msra.mxu0 0.0
  %72 = vmatprep.subr.mxu0 0.0
  %73 = vmatpush1.msra.mxu0 0.0
  %74 = vmatprep.subr.mxu0 0.0
  %75 = vmatpush1.msra.mxu0 0.0
  %76 = vmatprep.subr.mxu0 0.0
  %77 = vmatpush1.msra.mxu0 0.0
  %78 = vmatprep.subr.mxu0 0.0
  %79 = vmatpush1.msra.mxu0 0.0
  %80 = vmatprep.subr.mxu0 0.0
  %81 = vmatpush1.msra.mxu0 0.0
  %82 = vmatprep.subr.mxu0 0.0
  %83 = vmatpush1.msra.mxu0 0.0
  %84 = vmatprep.subr.mxu0 0.0
  %85 = vmatpush1.msra.mxu0 0.0
  %86 = vmatprep.subr.mxu0 0.0
  %87 = vmatpush1.msra.mxu0 0.0
  %88 = vmatprep.subr.mxu0 0.0
  %89 = vmatpush1.msra.mxu0 0.0
  %90 = vmatprep.subr.mxu0 0.0
  %91 = vmatpush1.msra.mxu0 0.0
  %92 = vmatprep.subr.mxu0 0.0
  %93 = vmatpush1.msra.mxu0 0.0
  %94 = vmatprep.subr.mxu0 0.0
  %95 = vmatpush1.msra.mxu0 0.0
  %96 = vmatprep.subr.mxu0 0.0
  %97 = vmatpush1.msra.mxu0 0.0
  %98 = vmatprep.subr.mxu0 0.0
  %99 = vmatpush1.msra.mxu0 0.0
  %100 = vmatprep.mubr.f32.mxu0 0.0
  %101 = vmatmul.mubr.f32.gmra.mrb[0].mxu0 %v31
  %v102 = vpop.f32.mrb[0].mxu0
  %v103 = vadd.f32 %v27, %v102
  %v104 = vpop.f32.mrb[0].mxu0
  %105 = vmatprep.mubr.f32.mxu0 0.0
  %106 = vmatmul.mubr.f32.gmra.mrb[0].mxu0 %v34
  %v107 = vpop.f32.mrb[0].mxu0
  %v108 = vadd.f32 %v27, %v107
  %v109 = vpop.f32.mrb[0].mxu0
  %110 = vdwg.mxu0
  %vm111 = vcmask 523264
  %112 = vst.msk [vmem:[%s3] sm:$0xff] %vm111, %v103
  %113 = vst.msk [vmem:[%s3 + $0x8] sm:$0xff] %vm111, %v108
  %116 = vrot.lane.b32.xlu0 %v103, 64
  %v117 = vpop.permute.xlu0 %116
  %118 = vrot.lane.b32.xlu0 %v108, 64
  %v119 = vpop.permute.xlu0 %118
  %122 = vst.msk [vmem:[%s4] sm:$0xff] %vm111, %v117
  %123 = vst.msk [vmem:[%s4 + $0x8] sm:$0xff] %vm111, %v119
  // Predicated region
  $region14: #{_lambda_.20} parent=0 // pred_check
    _
  $region15: #{_lambda_.20} parent=0 // pred_check_branch
    %125 = sbr.rel (0) target = $region17
  $region16: #{_lambda_.20} parent=0 // pred_region
    _
  $region17: #{_lambda_.20} parent=0 // pred_fallthru
    _
  // Predicated region
  $region18: #{_lambda_.20} parent=0 // pred_check
    _
  $region19: #{_lambda_.20} parent=0 // pred_check_branch
    %127 = sbr.rel (0) target = $region21
  $region20: #{_lambda_.20} parent=0 // pred_region
    _
  $region21: #{_lambda_.20} parent=0 // pred_fallthru
    _
  // Predicated region
  $region22: #{_lambda_.20} parent=0 // pred_check
    _
  $region23: #{_lambda_.20} parent=0 // pred_check_branch
    %129 = sbr.rel (0) target = $region25
  $region24: #{_lambda_.20} parent=0 // pred_region
    _
  $region25: #{_lambda_.20} parent=0 // pred_fallthru
    _
  // Predicated region
  $region26: #{_lambda_.20} parent=0 // pred_check
    _
  $region27: #{_lambda_.20} parent=0 // pred_check_branch
    %131 = sbr.rel (0) target = $region29
  $region28: #{_lambda_.20} parent=0 // pred_region
    _
  $region29: #{_lambda_.20} parent=0 // pred_fallthru
    _

// kernel: _lambda_.31
$region0: #{_lambda_.31}
  #allocation0 [shape = 'u32[]', space=smem, size = 0x4, offset = 0x4, fixed_abs, tag = 'smem constant byte address 0x4 - core index']
  #allocation1 [shape = 'u32[144,128]{1,0:T(1,128)}', space=vmem, size = 0x12000, scoped, tag = 'internal scratch']
  %s0 = inlined_call_operand.vmem [shape: f32[16,32], index: 0, kind: input, shape index: {}]
  %s1 = inlined_call_operand.vmem [shape: f32[1,32], index: 1, kind: input, shape index: {}]
  %s2 = inlined_call_operand.vmem [shape: f32[1,32], index: 2, kind: input, shape index: {}]
  %s3 = inlined_call_operand.vmem [shape: f32[32,32], index: 3, kind: input, shape index: {}]
  %s4 = inlined_call_operand.vmem [shape: f32[1,32], index: 4, kind: input, shape index: {}]
  %s5 = inlined_call_operand.vmem [shape: f32[32,32], index: 5, kind: input, shape index: {}]
  %s6 = inlined_call_operand.vmem [shape: f32[1,32], index: 6, kind: input, shape index: {}]
  %s7 = inlined_call_operand.hbm [shape: f32[16,32], index: 7, kind: output, shape index: {}]
  %s8 = sld [smem:[#allocation0]]
  $region38: #{_lambda_.31} parent=0
    _
  %s10 = ssub.s32 1, %s8
  %s11 = scalar_select 0, %s10, %s8
  $region1: #{_lambda_.31} parent=0
    #allocation2 [shape = 'u8[8192]{0}', space=vmem, size = 0x2000, scoped, tag = 'output window, operand 0, single buffered']
    #allocation3 [shape = 's32[1]{0}', space=sflag, size = 0x4, scoped, tag = 'scoped memory for _lambda_.31']
    %12 = vsyncpa [#allocation3], 0
    // Predicated region
    $region2: #{_lambda_.31} parent=1 // pred_check
      _
    $region3: #{_lambda_.31} parent=1 // pred_check_branch
      %14 = sbr.rel (0) target = $region5
    $region4: #{_lambda_.31} parent=1 // pred_region
      _
    $region5: #{_lambda_.31} parent=1 // pred_fallthru
      _
    // Predicated region
    $region6: #{_lambda_.31} parent=1 // pred_check
      _
    $region7: #{_lambda_.31} parent=1 // pred_check_branch
      %16 = sbr.rel (0) target = $region9
    $region8: #{_lambda_.31} parent=1 // pred_region
      _
    $region9: #{_lambda_.31} parent=1 // pred_fallthru
      _
    // Predicated region
    $region10: #{_lambda_.31} parent=1 // pred_check
      _
    $region11: #{_lambda_.31} parent=1 // pred_check_branch
      %18 = sbr.rel (0) target = $region13
    $region12: #{_lambda_.31} parent=1 // pred_region
      _
    $region13: #{_lambda_.31} parent=1 // pred_fallthru
      _
    // Predicated region
    $region14: #{_lambda_.31} parent=1 // pred_check
      _
    $region15: #{_lambda_.31} parent=1 // pred_check_branch
      %20 = sbr.rel (0) target = $region17
    $region16: #{_lambda_.31} parent=1 // pred_region
      _
    $region17: #{_lambda_.31} parent=1 // pred_fallthru
      _
    // Predicated region
    $region18: #{_lambda_.31} parent=1 // pred_check
      _
    $region19: #{_lambda_.31} parent=1 // pred_check_branch
      %22 = sbr.rel (0) target = $region21
    $region20: #{_lambda_.31} parent=1 // pred_region
      _
    $region21: #{_lambda_.31} parent=1 // pred_fallthru
      _
    // Predicated region
    $region22: #{_lambda_.31} parent=1 // pred_check
      _
    $region23: #{_lambda_.31} parent=1 // pred_check_branch
      %24 = sbr.rel (0) target = $region25
    $region24: #{_lambda_.31} parent=1 // pred_region
      _
    $region25: #{_lambda_.31} parent=1 // pred_fallthru
      _
    // Predicated region
    $region26: #{_lambda_.31} parent=1 // pred_check
      _
    $region27: #{_lambda_.31} parent=1 // pred_check_branch
      %26 = sbr.rel (0) target = $region29
    $region28: #{_lambda_.31} parent=1 // pred_region
      _
    $region29: #{_lambda_.31} parent=1 // pred_fallthru
      _
    %v27 = vld [vmem:[%s0] sm:$0xff]
    %v28 = vld [vmem:[%s0 + $0x8] sm:$0xff]
    %v29 = vld [vmem:[%s1] sm:$0x1]
    %v30 = vld [vmem:[%s2] sm:$0x1]
    %vm31 = vcmask 261120
    %v32 = vsel %vm31, %v27, 0.0
    %33 = vadd.xlane.f32.xlu0 %v32
    %v34 = vpop.xlane.xlu0 %33
    %v35 = vsel %vm31, %v28, 0.0
    %36 = vadd.xlane.f32.xlu0 %v35
    %v37 = vpop.xlane.xlu0 %36
    %v38 = vrcp.pop 32.0
    %v39 = vmul.f32 %v34, %v38
    %v40 = vmul.f32 %v37, %v38
    %v41 = vsub.f32 %v27, %v39
    %v42 = vsub.f32 %v28, %v40
    %v43 = vmul.f32 %v41, %v41
    %v44 = vmul.f32 %v42, %v42
    %v45 = vsel %vm31, %v43, 0.0
    %46 = vadd.xlane.f32.xlu0 %v45
    %v47 = vpop.xlane.xlu0 %46
    %v48 = vsel %vm31, %v44, 0.0
    %49 = vadd.xlane.f32.xlu0 %v48
    %v50 = vpop.xlane.xlu0 %49
    %v51 = vrcp.pop 31.0
    %v52 = vmul.f32 %v47, %v51
    %v53 = vmul.f32 %v50, %v51
    %v54 = vrsqrt.pop %v52
    %v55 = vmul.f32 %v52, %v54
    %vm56 = vcmp.eq.f32.partialorder %v52, inf
    %v57 = vsel %vm56, %v52, %v55
    %vm58 = vcmp.eq.f32.partialorder %v52, 0.0
    %v59 = vand.u32 %v52, 2147483648
    %v60 = vsel %vm58, %v59, %v57
    %v61 = vrsqrt.pop %v53
    %v62 = vmul.f32 %v53, %v61
    %vm63 = vcmp.eq.f32.partialorder %v53, inf
    %v64 = vsel %vm63, %v53, %v62
    %vm65 = vcmp.eq.f32.partialorder %v53, 0.0
    %v66 = vand.u32 %v53, 2147483648
    %v67 = vsel %vm65, %v66, %v64
    %v69 = vlaneseq
    %v70 = vshrl.u32 %v69, 7
    %v71 = vsub.s32 0, %v70
    %v72 = vrot.slane %v29, %v71
    %v74 = vmul.f32 %v72, %v41
    %v75 = vmul.f32 %v72, %v42
    %v76 = vadd.f32 %v60, 1e-06
    %v77 = vadd.f32 %v67, 1e-06
    %v78 = vrcp.pop %v76
    %v79 = vmul.f32 %v74, %v78
    %v80 = vrcp.pop %v77
    %v81 = vmul.f32 %v75, %v80
    %v83 = vlaneseq
    %v84 = vshrl.u32 %v83, 7
    %v85 = vsub.s32 0, %v84
    %v86 = vrot.slane %v30, %v85
    %v88 = vadd.f32 %v79, %v86
    %v89 = vadd.f32 %v81, %v86
    %v90 = vld [vmem:[%s3] sm:$0xff]
    %v91 = vld [vmem:[%s3 + $0x8] sm:$0xff]
    %v92 = vld [vmem:[%s3 + $0x10] sm:$0xff]
    %v93 = vld [vmem:[%s3 + $0x18] sm:$0xff]
    %v94 = vld [vmem:[%s4] sm:$0x1]
    %v96 = vlaneseq
    %v97 = vshrl.u32 %v96, 7
    %v98 = vsub.s32 0, %v97
    %v99 = vrot.slane %v94, %v98
    %v102 = vsel %vm31, %v88, 0
    %v105 = vsel %vm31, %v89, 0
    %107 = vmatprep.subr.mxu0 0.0
    %108 = vmatpush1.msra.mxu0 %v90
    %109 = vmatprep.subr.mxu0 0.0
    %110 = vmatpush1.msra.mxu0 %v91
    %111 = vmatprep.subr.mxu0 0.0
    %112 = vmatpush1.msra.mxu0 %v92
    %113 = vmatprep.subr.mxu0 0.0
    %114 = vmatpush1.msra.mxu0 %v93
    %115 = vmatprep.subr.mxu0 0.0
    %116 = vmatpush1.msra.mxu0 0.0
    %117 = vmatprep.subr.mxu0 0.0
    %118 = vmatpush1.msra.mxu0 0.0
    %119 = vmatprep.subr.mxu0 0.0
    %120 = vmatpush1.msra.mxu0 0.0
    %121 = vmatprep.subr.mxu0 0.0
    %122 = vmatpush1.msra.mxu0 0.0
    %123 = vmatprep.subr.mxu0 0.0
    %124 = vmatpush1.msra.mxu0 0.0
    %125 = vmatprep.subr.mxu0 0.0
    %126 = vmatpush1.msra.mxu0 0.0
    %127 = vmatprep.subr.mxu0 0.0
    %128 = vmatpush1.msra.mxu0 0.0
    %129 = vmatprep.subr.mxu0 0.0
    %130 = vmatpush1.msra.mxu0 0.0
    %131 = vmatprep.subr.mxu0 0.0
    %132 = vmatpush1.msra.mxu0 0.0
    %133 = vmatprep.subr.mxu0 0.0
    %134 = vmatpush1.msra.mxu0 0.0
    %135 = vmatprep.subr.mxu0 0.0
    %136 = vmatpush1.msra.mxu0 0.0
    %137 = vmatprep.subr.mxu0 0.0
    %138 = vmatpush1.msra.mxu0 0.0
    %139 = vmatprep.subr.mxu0 0.0
    %140 = vmatpush1.msra.mxu0 0.0
    %141 = vmatprep.subr.mxu0 0.0
    %142 = vmatpush1.msra.mxu0 0.0
    %143 = vmatprep.subr.mxu0 0.0
    %144 = vmatpush1.msra.mxu0 0.0
    %145 = vmatprep.subr.mxu0 0.0
    %146 = vmatpush1.msra.mxu0 0.0
    %147 = vmatprep.subr.mxu0 0.0
    %148 = vmatpush1.msra.mxu0 0.0
    %149 = vmatprep.subr.mxu0 0.0
    %150 = vmatpush1.msra.mxu0 0.0
    %151 = vmatprep.subr.mxu0 0.0
    %152 = vmatpush1.msra.mxu0 0.0
    %153 = vmatprep.subr.mxu0 0.0
    %154 = vmatpush1.msra.mxu0 0.0
    %155 = vmatprep.subr.mxu0 0.0
    %156 = vmatpush1.msra.mxu0 0.0
    %157 = vmatprep.subr.mxu0 0.0
    %158 = vmatpush1.msra.mxu0 0.0
    %159 = vmatprep.subr.mxu0 0.0
    %160 = vmatpush1.msra.mxu0 0.0
    %161 = vmatprep.subr.mxu0 0.0
    %162 = vmatpush1.msra.mxu0 0.0
    %163 = vmatprep.subr.mxu0 0.0
    %164 = vmatpush1.msra.mxu0 0.0
    %165 = vmatprep.subr.mxu0 0.0
    %166 = vmatpush1.msra.mxu0 0.0
    %167 = vmatprep.subr.mxu0 0.0
    %168 = vmatpush1.msra.mxu0 0.0
    %169 = vmatprep.subr.mxu0 0.0
    %170 = vmatpush1.msra.mxu0 0.0
    %171 = vmatprep.mubr.f32.mxu0 0.0
    %172 = vmatmul.mubr.f32.gmra.mrb[0].mxu0 %v102
    %v173 = vpop.f32.mrb[0].mxu0
    %v174 = vadd.f32 %v99, %v173
    %v175 = vpop.f32.mrb[0].mxu0
    %176 = vmatprep.mubr.f32.mxu0 0.0
    %177 = vmatmul.mubr.f32.gmra.mrb[0].mxu0 %v105
    %v178 = vpop.f32.mrb[0].mxu0
    %v179 = vadd.f32 %v99, %v178
    %v180 = vpop.f32.mrb[0].mxu0
    %181 = vdwg.mxu0
    %v182 = vmax.f32 %v174, 0.0
    %v183 = vmax.f32 %v179, 0.0
    %v184 = vld [vmem:[%s5] sm:$0xff]
    %v185 = vld [vmem:[%s5 + $0x8] sm:$0xff]
    %v186 = vld [vmem:[%s5 + $0x10] sm:$0xff]
    %v187 = vld [vmem:[%s5 + $0x18] sm:$0xff]
    %v188 = vld [vmem:[%s6] sm:$0x1]
    %v190 = vlaneseq
    %v191 = vshrl.u32 %v190, 7
    %v192 = vsub.s32 0, %v191
    %v193 = vrot.slane %v188, %v192
    %v196 = vsel %vm31, %v182, 0
    %v199 = vsel %vm31, %v183, 0
    %201 = vmatprep.subr.mxu0 0.0
    %202 = vmatpush1.msra.mxu0 %v184
    %203 = vmatprep.subr.mxu0 0.0
    %204 = vmatpush1.msra.mxu0 %v185
    %205 = vmatprep.subr.mxu0 0.0
    %206 = vmatpush1.msra.mxu0 %v186
    %207 = vmatprep.subr.mxu0 0.0
    %208 = vmatpush1.msra.mxu0 %v187
    %209 = vmatprep.subr.mxu0 0.0
    %210 = vmatpush1.msra.mxu0 0.0
    %211 = vmatprep.subr.mxu0 0.0
    %212 = vmatpush1.msra.mxu0 0.0
    %213 = vmatprep.subr.mxu0 0.0
    %214 = vmatpush1.msra.mxu0 0.0
    %215 = vmatprep.subr.mxu0 0.0
    %216 = vmatpush1.msra.mxu0 0.0
    %217 = vmatprep.subr.mxu0 0.0
    %218 = vmatpush1.msra.mxu0 0.0
    %219 = vmatprep.subr.mxu0 0.0
    %220 = vmatpush1.msra.mxu0 0.0
    %221 = vmatprep.subr.mxu0 0.0
    %222 = vmatpush1.msra.mxu0 0.0
    %223 = vmatprep.subr.mxu0 0.0
    %224 = vmatpush1.msra.mxu0 0.0
    %225 = vmatprep.subr.mxu0 0.0
    %226 = vmatpush1.msra.mxu0 0.0
    %227 = vmatprep.subr.mxu0 0.0
    %228 = vmatpush1.msra.mxu0 0.0
    %229 = vmatprep.subr.mxu0 0.0
    %230 = vmatpush1.msra.mxu0 0.0
    %231 = vmatprep.subr.mxu0 0.0
    %232 = vmatpush1.msra.mxu0 0.0
    %233 = vmatprep.subr.mxu0 0.0
    %234 = vmatpush1.msra.mxu0 0.0
    %235 = vmatprep.subr.mxu0 0.0
    %236 = vmatpush1.msra.mxu0 0.0
    %237 = vmatprep.subr.mxu0 0.0
    %238 = vmatpush1.msra.mxu0 0.0
    %239 = vmatprep.subr.mxu0 0.0
    %240 = vmatpush1.msra.mxu0 0.0
    %241 = vmatprep.subr.mxu0 0.0
    %242 = vmatpush1.msra.mxu0 0.0
    %243 = vmatprep.subr.mxu0 0.0
    %244 = vmatpush1.msra.mxu0 0.0
    %245 = vmatprep.subr.mxu0 0.0
    %246 = vmatpush1.msra.mxu0 0.0
    %247 = vmatprep.subr.mxu0 0.0
    %248 = vmatpush1.msra.mxu0 0.0
    %249 = vmatprep.subr.mxu0 0.0
    %250 = vmatpush1.msra.mxu0 0.0
    %251 = vmatprep.subr.mxu0 0.0
    %252 = vmatpush1.msra.mxu0 0.0
    %253 = vmatprep.subr.mxu0 0.0
    %254 = vmatpush1.msra.mxu0 0.0
    %255 = vmatprep.subr.mxu0 0.0
    %256 = vmatpush1.msra.mxu0 0.0
    %257 = vmatprep.subr.mxu0 0.0
    %258 = vmatpush1.msra.mxu0 0.0
    %259 = vmatprep.subr.mxu0 0.0
    %260 = vmatpush1.msra.mxu0 0.0
    %261 = vmatprep.subr.mxu0 0.0
    %262 = vmatpush1.msra.mxu0 0.0
    %263 = vmatprep.subr.mxu0 0.0
    %264 = vmatpush1.msra.mxu0 0.0
    %265 = vmatprep.mubr.f32.mxu0 0.0
    %266 = vmatmul.mubr.f32.gmra.mrb[0].mxu0 %v196
    %v267 = vpop.f32.mrb[0].mxu0
    %v268 = vadd.f32 %v193, %v267
    %v269 = vpop.f32.mrb[0].mxu0
    %270 = vmatprep.mubr.f32.mxu0 0.0
    %271 = vmatmul.mubr.f32.gmra.mrb[0].mxu0 %v199
    %v272 = vpop.f32.mrb[0].mxu0
    %v273 = vadd.f32 %v193, %v272
    %v274 = vpop.f32.mrb[0].mxu0
    %275 = vdwg.mxu0
    %v276 = vadd.f32 %v268, %v27
    %v277 = vadd.f32 %v273, %v28
    %278 = vst.msk [vmem:[#allocation2] sm:$0xff] %vm31, %v276
    %279 = vst.msk [vmem:[#allocation2 + $0x8] sm:$0xff] %vm31, %v277
    // Predicated region
    $region30: #{_lambda_.31} parent=1 // pred_check
      _
    $region31: #{_lambda_.31} parent=1 // pred_check_branch
      %281 = sbr.rel (0) target = $region33
    $region32: #{_lambda_.31} parent=1 // pred_region
      %s283 = ssub.s32 256, 256
      %284 = vsyncadd [#allocation3], %s283
      %s285 = sshll.u32 [#allocation2], 4
      %s286 = int_to_ptr.vmem [resolvable:$true] %s285
      %291 = dma.vmem_to_hbm [thread:$0]  %s286, 256, %s7, [#allocation3], 128, 128, 8
    $region33: #{_lambda_.31} parent=1 // pred_fallthru
      _
    // Predicated region
    $region34: #{_lambda_.31} parent=1 // pred_check
      _
    $region35: #{_lambda_.31} parent=1 // pred_check_branch
      %293 = sbr.rel (0) target = $region37
    $region36: #{_lambda_.31} parent=1 // pred_region
      %294 = dma.done [#allocation3], 256
    $region37: #{_lambda_.31} parent=1 // pred_fallthru
      _
    %295 = vsyncpa [#allocation3], 1

// kernel: _lambda_.23
$region0: #{_lambda_.23}
  #allocation0 [shape = 'u32[]', space=smem, size = 0x4, offset = 0x4, fixed_abs, tag = 'smem constant byte address 0x4 - core index']
  #allocation1 [shape = 'u32[144,128]{1,0:T(1,128)}', space=vmem, size = 0x12000, scoped, tag = 'internal scratch']
  %s0 = inlined_call_operand.vmem [shape: f32[16,32], index: 0, kind: input, shape index: {}]
  %s1 = inlined_call_operand.vmem [shape: f32[1,32], index: 1, kind: input, shape index: {}]
  %s2 = inlined_call_operand.vmem [shape: f32[1,32], index: 2, kind: input, shape index: {}]
  %s3 = inlined_call_operand.vmem [shape: f32[32,32], index: 3, kind: input, shape index: {}]
  %s4 = inlined_call_operand.vmem [shape: f32[1,32], index: 4, kind: input, shape index: {}]
  %s5 = inlined_call_operand.vmem [shape: f32[32,32], index: 5, kind: input, shape index: {}]
  %s6 = inlined_call_operand.vmem [shape: f32[1,32], index: 6, kind: input, shape index: {}]
  %s7 = inlined_call_operand.vmem [shape: f32[16,32], index: 7, kind: output, shape index: {}]
  %s8 = sld [smem:[#allocation0]]
  $region38: #{_lambda_.23} parent=0
    _
  %s10 = ssub.s32 1, %s8
  %s11 = scalar_select 0, %s10, %s8
  // Predicated region
  $region2: #{_lambda_.23} parent=0 // pred_check
    _
  $region3: #{_lambda_.23} parent=0 // pred_check_branch
    %13 = sbr.rel (0) target = $region5
  $region4: #{_lambda_.23} parent=0 // pred_region
    _
  $region5: #{_lambda_.23} parent=0 // pred_fallthru
    _
  // Predicated region
  $region6: #{_lambda_.23} parent=0 // pred_check
    _
  $region7: #{_lambda_.23} parent=0 // pred_check_branch
    %15 = sbr.rel (0) target = $region9
  $region8: #{_lambda_.23} parent=0 // pred_region
    _
  $region9: #{_lambda_.23} parent=0 // pred_fallthru
    _
  // Predicated region
  $region10: #{_lambda_.23} parent=0 // pred_check
    _
  $region11: #{_lambda_.23} parent=0 // pred_check_branch
    %17 = sbr.rel (0) target = $region13
  $region12: #{_lambda_.23} parent=0 // pred_region
    _
  $region13: #{_lambda_.23} parent=0 // pred_fallthru
    _
  // Predicated region
  $region14: #{_lambda_.23} parent=0 // pred_check
    _
  $region15: #{_lambda_.23} parent=0 // pred_check_branch
    %19 = sbr.rel (0) target = $region17
  $region16: #{_lambda_.23} parent=0 // pred_region
    _
  $region17: #{_lambda_.23} parent=0 // pred_fallthru
    _
  // Predicated region
  $region18: #{_lambda_.23} parent=0 // pred_check
    _
  $region19: #{_lambda_.23} parent=0 // pred_check_branch
    %21 = sbr.rel (0) target = $region21
  $region20: #{_lambda_.23} parent=0 // pred_region
    _
  $region21: #{_lambda_.23} parent=0 // pred_fallthru
    _
  // Predicated region
  $region22: #{_lambda_.23} parent=0 // pred_check
    _
  $region23: #{_lambda_.23} parent=0 // pred_check_branch
    %23 = sbr.rel (0) target = $region25
  $region24: #{_lambda_.23} parent=0 // pred_region
    _
  $region25: #{_lambda_.23} parent=0 // pred_fallthru
    _
  // Predicated region
  $region26: #{_lambda_.23} parent=0 // pred_check
    _
  $region27: #{_lambda_.23} parent=0 // pred_check_branch
    %25 = sbr.rel (0) target = $region29
  $region28: #{_lambda_.23} parent=0 // pred_region
    _
  $region29: #{_lambda_.23} parent=0 // pred_fallthru
    _
  %v26 = vld [vmem:[%s0] sm:$0xff]
  %v27 = vld [vmem:[%s0 + $0x8] sm:$0xff]
  %v28 = vld [vmem:[%s1] sm:$0x1]
  %v29 = vld [vmem:[%s2] sm:$0x1]
  %vm30 = vcmask 261120
  %v31 = vsel %vm30, %v26, 0.0
  %32 = vadd.xlane.f32.xlu0 %v31
  %v33 = vpop.xlane.xlu0 %32
  %v34 = vsel %vm30, %v27, 0.0
  %35 = vadd.xlane.f32.xlu0 %v34
  %v36 = vpop.xlane.xlu0 %35
  %v37 = vrcp.pop 32.0
  %v38 = vmul.f32 %v33, %v37
  %v39 = vmul.f32 %v36, %v37
  %v40 = vsub.f32 %v26, %v38
  %v41 = vsub.f32 %v27, %v39
  %v42 = vmul.f32 %v40, %v40
  %v43 = vmul.f32 %v41, %v41
  %v44 = vsel %vm30, %v42, 0.0
  %45 = vadd.xlane.f32.xlu0 %v44
  %v46 = vpop.xlane.xlu0 %45
  %v47 = vsel %vm30, %v43, 0.0
  %48 = vadd.xlane.f32.xlu0 %v47
  %v49 = vpop.xlane.xlu0 %48
  %v50 = vrcp.pop 31.0
  %v51 = vmul.f32 %v46, %v50
  %v52 = vmul.f32 %v49, %v50
  %v53 = vrsqrt.pop %v51
  %v54 = vmul.f32 %v51, %v53
  %vm55 = vcmp.eq.f32.partialorder %v51, inf
  %v56 = vsel %vm55, %v51, %v54
  %vm57 = vcmp.eq.f32.partialorder %v51, 0.0
  %v58 = vand.u32 %v51, 2147483648
  %v59 = vsel %vm57, %v58, %v56
  %v60 = vrsqrt.pop %v52
  %v61 = vmul.f32 %v52, %v60
  %vm62 = vcmp.eq.f32.partialorder %v52, inf
  %v63 = vsel %vm62, %v52, %v61
  %vm64 = vcmp.eq.f32.partialorder %v52, 0.0
  %v65 = vand.u32 %v52, 2147483648
  %v66 = vsel %vm64, %v65, %v63
  %v68 = vlaneseq
  %v69 = vshrl.u32 %v68, 7
  %v70 = vsub.s32 0, %v69
  %v71 = vrot.slane %v28, %v70
  %v73 = vmul.f32 %v71, %v40
  %v74 = vmul.f32 %v71, %v41
  %v75 = vadd.f32 %v59, 1e-06
  %v76 = vadd.f32 %v66, 1e-06
  %v77 = vrcp.pop %v75
  %v78 = vmul.f32 %v73, %v77
  %v79 = vrcp.pop %v76
  %v80 = vmul.f32 %v74, %v79
  %v82 = vlaneseq
  %v83 = vshrl.u32 %v82, 7
  %v84 = vsub.s32 0, %v83
  %v85 = vrot.slane %v29, %v84
  %v87 = vadd.f32 %v78, %v85
  %v88 = vadd.f32 %v80, %v85
  %v89 = vld [vmem:[%s3] sm:$0xff]
  %v90 = vld [vmem:[%s3 + $0x8] sm:$0xff]
  %v91 = vld [vmem:[%s3 + $0x10] sm:$0xff]
  %v92 = vld [vmem:[%s3 + $0x18] sm:$0xff]
  %v93 = vld [vmem:[%s4] sm:$0x1]
  %v95 = vlaneseq
  %v96 = vshrl.u32 %v95, 7
  %v97 = vsub.s32 0, %v96
  %v98 = vrot.slane %v93, %v97
  %v101 = vsel %vm30, %v87, 0
  %v104 = vsel %vm30, %v88, 0
  %106 = vmatprep.subr.mxu0 0.0
  %107 = vmatpush1.msra.mxu0 %v89
  %108 = vmatprep.subr.mxu0 0.0
  %109 = vmatpush1.msra.mxu0 %v90
  %110 = vmatprep.subr.mxu0 0.0
  %111 = vmatpush1.msra.mxu0 %v91
  %112 = vmatprep.subr.mxu0 0.0
  %113 = vmatpush1.msra.mxu0 %v92
  %114 = vmatprep.subr.mxu0 0.0
  %115 = vmatpush1.msra.mxu0 0.0
  %116 = vmatprep.subr.mxu0 0.0
  %117 = vmatpush1.msra.mxu0 0.0
  %118 = vmatprep.subr.mxu0 0.0
  %119 = vmatpush1.msra.mxu0 0.0
  %120 = vmatprep.subr.mxu0 0.0
  %121 = vmatpush1.msra.mxu0 0.0
  %122 = vmatprep.subr.mxu0 0.0
  %123 = vmatpush1.msra.mxu0 0.0
  %124 = vmatprep.subr.mxu0 0.0
  %125 = vmatpush1.msra.mxu0 0.0
  %126 = vmatprep.subr.mxu0 0.0
  %127 = vmatpush1.msra.mxu0 0.0
  %128 = vmatprep.subr.mxu0 0.0
  %129 = vmatpush1.msra.mxu0 0.0
  %130 = vmatprep.subr.mxu0 0.0
  %131 = vmatpush1.msra.mxu0 0.0
  %132 = vmatprep.subr.mxu0 0.0
  %133 = vmatpush1.msra.mxu0 0.0
  %134 = vmatprep.subr.mxu0 0.0
  %135 = vmatpush1.msra.mxu0 0.0
  %136 = vmatprep.subr.mxu0 0.0
  %137 = vmatpush1.msra.mxu0 0.0
  %138 = vmatprep.subr.mxu0 0.0
  %139 = vmatpush1.msra.mxu0 0.0
  %140 = vmatprep.subr.mxu0 0.0
  %141 = vmatpush1.msra.mxu0 0.0
  %142 = vmatprep.subr.mxu0 0.0
  %143 = vmatpush1.msra.mxu0 0.0
  %144 = vmatprep.subr.mxu0 0.0
  %145 = vmatpush1.msra.mxu0 0.0
  %146 = vmatprep.subr.mxu0 0.0
  %147 = vmatpush1.msra.mxu0 0.0
  %148 = vmatprep.subr.mxu0 0.0
  %149 = vmatpush1.msra.mxu0 0.0
  %150 = vmatprep.subr.mxu0 0.0
  %151 = vmatpush1.msra.mxu0 0.0
  %152 = vmatprep.subr.mxu0 0.0
  %153 = vmatpush1.msra.mxu0 0.0
  %154 = vmatprep.subr.mxu0 0.0
  %155 = vmatpush1.msra.mxu0 0.0
  %156 = vmatprep.subr.mxu0 0.0
  %157 = vmatpush1.msra.mxu0 0.0
  %158 = vmatprep.subr.mxu0 0.0
  %159 = vmatpush1.msra.mxu0 0.0
  %160 = vmatprep.subr.mxu0 0.0
  %161 = vmatpush1.msra.mxu0 0.0
  %162 = vmatprep.subr.mxu0 0.0
  %163 = vmatpush1.msra.mxu0 0.0
  %164 = vmatprep.subr.mxu0 0.0
  %165 = vmatpush1.msra.mxu0 0.0
  %166 = vmatprep.subr.mxu0 0.0
  %167 = vmatpush1.msra.mxu0 0.0
  %168 = vmatprep.subr.mxu0 0.0
  %169 = vmatpush1.msra.mxu0 0.0
  %170 = vmatprep.mubr.f32.mxu0 0.0
  %171 = vmatmul.mubr.f32.gmra.mrb[0].mxu0 %v101
  %v172 = vpop.f32.mrb[0].mxu0
  %v173 = vadd.f32 %v98, %v172
  %v174 = vpop.f32.mrb[0].mxu0
  %175 = vmatprep.mubr.f32.mxu0 0.0
  %176 = vmatmul.mubr.f32.gmra.mrb[0].mxu0 %v104
  %v177 = vpop.f32.mrb[0].mxu0
  %v178 = vadd.f32 %v98, %v177
  %v179 = vpop.f32.mrb[0].mxu0
  %180 = vdwg.mxu0
  %v181 = vmax.f32 %v173, 0.0
  %v182 = vmax.f32 %v178, 0.0
  %v183 = vld [vmem:[%s5] sm:$0xff]
  %v184 = vld [vmem:[%s5 + $0x8] sm:$0xff]
  %v185 = vld [vmem:[%s5 + $0x10] sm:$0xff]
  %v186 = vld [vmem:[%s5 + $0x18] sm:$0xff]
  %v187 = vld [vmem:[%s6] sm:$0x1]
  %v189 = vlaneseq
  %v190 = vshrl.u32 %v189, 7
  %v191 = vsub.s32 0, %v190
  %v192 = vrot.slane %v187, %v191
  %v195 = vsel %vm30, %v181, 0
  %v198 = vsel %vm30, %v182, 0
  %200 = vmatprep.subr.mxu0 0.0
  %201 = vmatpush1.msra.mxu0 %v183
  %202 = vmatprep.subr.mxu0 0.0
  %203 = vmatpush1.msra.mxu0 %v184
  %204 = vmatprep.subr.mxu0 0.0
  %205 = vmatpush1.msra.mxu0 %v185
  %206 = vmatprep.subr.mxu0 0.0
  %207 = vmatpush1.msra.mxu0 %v186
  %208 = vmatprep.subr.mxu0 0.0
  %209 = vmatpush1.msra.mxu0 0.0
  %210 = vmatprep.subr.mxu0 0.0
  %211 = vmatpush1.msra.mxu0 0.0
  %212 = vmatprep.subr.mxu0 0.0
  %213 = vmatpush1.msra.mxu0 0.0
  %214 = vmatprep.subr.mxu0 0.0
  %215 = vmatpush1.msra.mxu0 0.0
  %216 = vmatprep.subr.mxu0 0.0
  %217 = vmatpush1.msra.mxu0 0.0
  %218 = vmatprep.subr.mxu0 0.0
  %219 = vmatpush1.msra.mxu0 0.0
  %220 = vmatprep.subr.mxu0 0.0
  %221 = vmatpush1.msra.mxu0 0.0
  %222 = vmatprep.subr.mxu0 0.0
  %223 = vmatpush1.msra.mxu0 0.0
  %224 = vmatprep.subr.mxu0 0.0
  %225 = vmatpush1.msra.mxu0 0.0
  %226 = vmatprep.subr.mxu0 0.0
  %227 = vmatpush1.msra.mxu0 0.0
  %228 = vmatprep.subr.mxu0 0.0
  %229 = vmatpush1.msra.mxu0 0.0
  %230 = vmatprep.subr.mxu0 0.0
  %231 = vmatpush1.msra.mxu0 0.0
  %232 = vmatprep.subr.mxu0 0.0
  %233 = vmatpush1.msra.mxu0 0.0
  %234 = vmatprep.subr.mxu0 0.0
  %235 = vmatpush1.msra.mxu0 0.0
  %236 = vmatprep.subr.mxu0 0.0
  %237 = vmatpush1.msra.mxu0 0.0
  %238 = vmatprep.subr.mxu0 0.0
  %239 = vmatpush1.msra.mxu0 0.0
  %240 = vmatprep.subr.mxu0 0.0
  %241 = vmatpush1.msra.mxu0 0.0
  %242 = vmatprep.subr.mxu0 0.0
  %243 = vmatpush1.msra.mxu0 0.0
  %244 = vmatprep.subr.mxu0 0.0
  %245 = vmatpush1.msra.mxu0 0.0
  %246 = vmatprep.subr.mxu0 0.0
  %247 = vmatpush1.msra.mxu0 0.0
  %248 = vmatprep.subr.mxu0 0.0
  %249 = vmatpush1.msra.mxu0 0.0
  %250 = vmatprep.subr.mxu0 0.0
  %251 = vmatpush1.msra.mxu0 0.0
  %252 = vmatprep.subr.mxu0 0.0
  %253 = vmatpush1.msra.mxu0 0.0
  %254 = vmatprep.subr.mxu0 0.0
  %255 = vmatpush1.msra.mxu0 0.0
  %256 = vmatprep.subr.mxu0 0.0
  %257 = vmatpush1.msra.mxu0 0.0
  %258 = vmatprep.subr.mxu0 0.0
  %259 = vmatpush1.msra.mxu0 0.0
  %260 = vmatprep.subr.mxu0 0.0
  %261 = vmatpush1.msra.mxu0 0.0
  %262 = vmatprep.subr.mxu0 0.0
  %263 = vmatpush1.msra.mxu0 0.0
  %264 = vmatprep.mubr.f32.mxu0 0.0
  %265 = vmatmul.mubr.f32.gmra.mrb[0].mxu0 %v195
  %v266 = vpop.f32.mrb[0].mxu0
  %v267 = vadd.f32 %v192, %v266
  %v268 = vpop.f32.mrb[0].mxu0
  %269 = vmatprep.mubr.f32.mxu0 0.0
  %270 = vmatmul.mubr.f32.gmra.mrb[0].mxu0 %v198
  %v271 = vpop.f32.mrb[0].mxu0
  %v272 = vadd.f32 %v192, %v271
  %v273 = vpop.f32.mrb[0].mxu0
  %274 = vdwg.mxu0
  %v275 = vadd.f32 %v267, %v26
  %v276 = vadd.f32 %v272, %v27
  %277 = vst.msk [vmem:[%s7] sm:$0xff] %vm30, %v275
  %278 = vst.msk [vmem:[%s7 + $0x8] sm:$0xff] %vm30, %v276
  // Predicated region
  $region30: #{_lambda_.23} parent=0 // pred_check
    _
  $region31: #{_lambda_.23} parent=0 // pred_check_branch
    %280 = sbr.rel (0) target = $region33
  $region32: #{_lambda_.23} parent=0 // pred_region
    _
  $region33: #{_lambda_.23} parent=0 // pred_fallthru
    _
  // Predicated region
  $region34: #{_lambda_.23} parent=0 // pred_check
    _
  $region35: #{_lambda_.23} parent=0 // pred_check_branch
    %282 = sbr.rel (0) target = $region37
  $region36: #{_lambda_.23} parent=0 // pred_region
    _
  $region37: #{_lambda_.23} parent=0 // pred_fallthru
    _

</llo_original>
